<compile_context>
chip_gen: v7x
topology: tpu7x:2x2x1
jax: 0.10.0
libtpu: 0.0.40
codegen_flags: <defaults>
</compile_context>

<pallas_src>
import functools
import math

import numpy as np
import jax
import jax.numpy as jnp
from jax.experimental import pallas as pl
from jax.experimental.pallas import tpu as pltpu


# ----------------------------- in-kernel building blocks -----------------------------

def _add_ln(x, r, g, b):
    """Residual add + LayerNorm over the feature axis (f32)."""
    y = x + r
    mean = jnp.mean(y, axis=-1, keepdims=True)
    var = jnp.mean((y - mean) ** 2, axis=-1, keepdims=True)
    return (y - mean) * jax.lax.rsqrt(var + 1e-5) * g + b


def _mha_block(x, ctx, mask, wq, wk, wv, wo, bq, bk, bv, bo, *, n_heads):
    """Multi-head attention for one batch element.

    x:    (Sq, D) f32        ctx: (Sk, D) f32      mask: (Sq, Sk) f32 (1=attend)
    wq/wk/wv: (H, D, dh)     wo: (H, dh, D)
    bq/bk/bv: (H, 1, dh)     bo: (1, D)
    Returns (Sq, D) f32.
    """
    Sq, D = x.shape
    Sk = ctx.shape[0]
    H = n_heads
    dh = D // H
    scale = 1.0 / math.sqrt(dh)

    bf = jnp.bfloat16
    xh = jnp.broadcast_to(x.astype(bf)[None], (H, Sq, D))     # replicate over heads
    ch = jnp.broadcast_to(ctx.astype(bf)[None], (H, Sk, D))

    # Batched per-head projections: (H, S, D) @ (H, D, dh) -> (H, S, dh)
    q = jnp.einsum('hsd,hdk->hsk', xh, wq.astype(bf),
                   preferred_element_type=jnp.float32) + bq
    k = jnp.einsum('hsd,hdk->hsk', ch, wk.astype(bf),
                   preferred_element_type=jnp.float32) + bk
    v = jnp.einsum('hsd,hdk->hsk', ch, wv.astype(bf),
                   preferred_element_type=jnp.float32) + bv

    # Scores (H, Sq, Sk), masked softmax in f32.
    s = jnp.einsum('hqe,hke->hqk', q.astype(bf), k.astype(bf),
                   preferred_element_type=jnp.float32) * scale
    s = jnp.where(mask[None] > 0.5, s, jnp.float32(-1e9))
    s = s - jnp.max(s, axis=-1, keepdims=True)
    p = jnp.exp(s)
    denom = jnp.sum(p, axis=-1, keepdims=True)
    p = p * pl.reciprocal(denom, approx=True)

    # Context (H, Sq, dh), then per-head output projection summed over heads.
    o = jnp.einsum('hqk,hke->hqe', p.astype(bf), v.astype(bf),
                   preferred_element_type=jnp.float32)
    out = jnp.einsum('hqe,hed->hqd', o.astype(bf), wo.astype(bf),
                     preferred_element_type=jnp.float32)
    return jnp.sum(out, axis=0) + bo


def _ffn_block(x, w1, b1, w2, b2):
    """Position-wise FFN (Linear -> ReLU -> Linear), bf16 matmuls / f32 accum."""
    bf = jnp.bfloat16
    h = jnp.dot(x.astype(bf), w1.astype(bf),
                preferred_element_type=jnp.float32) + b1
    h = jnp.maximum(h, 0.0)
    return jnp.dot(h.astype(bf), w2.astype(bf),
                   preferred_element_type=jnp.float32) + b2


# ----------------------------- fused layer kernels -----------------------------

def _encoder_layer_kernel(x_ref, mask_ref,
                          wq, wk, wv, wo, bq, bk, bv, bo,
                          ln1g, ln1b,
                          w1, b1, w2, b2,
                          ln2g, ln2b,
                          o_ref, *, n_heads):
    x = x_ref[0]                                   # (S, D)
    mask = mask_ref[0]                             # (S, S)
    a = _mha_block(x, x, mask,
                   wq[...], wk[...], wv[...], wo[...],
                   bq[...], bk[...], bv[...], bo[...], n_heads=n_heads)
    x = _add_ln(x, a, ln1g[...], ln1b[...])
    f = _ffn_block(x, w1[...], b1[...], w2[...], b2[...])
    x = _add_ln(x, f, ln2g[...], ln2b[...])
    o_ref[0] = x


def _decoder_layer_kernel(x_ref, enc_ref, xm_ref, em_ref,
                          swq, swk, swv, swo, sbq, sbk, sbv, sbo,
                          ln1g, ln1b,
                          cwq, cwk, cwv, cwo, cbq, cbk, cbv, cbo,
                          ln2g, ln2b,
                          w1, b1, w2, b2,
                          ln3g, ln3b,
                          o_ref, *, n_heads):
    x = x_ref[0]                                   # (Sq, D)
    enc = enc_ref[0]                               # (Sk, D)
    a = _mha_block(x, x, xm_ref[0],
                   swq[...], swk[...], swv[...], swo[...],
                   sbq[...], sbk[...], sbv[...], sbo[...], n_heads=n_heads)
    x = _add_ln(x, a, ln1g[...], ln1b[...])
    c = _mha_block(x, enc, em_ref[0],
                   cwq[...], cwk[...], cwv[...], cwo[...],
                   cbq[...], cbk[...], cbv[...], cbo[...], n_heads=n_heads)
    x = _add_ln(x, c, ln2g[...], ln2b[...])
    f = _ffn_block(x, w1[...], b1[...], w2[...], b2[...])
    x = _add_ln(x, f, ln3g[...], ln3b[...])
    o_ref[0] = x


def _final_linear_kernel(x_ref, w_ref, b_ref, o_ref):
    bf = jnp.bfloat16
    o_ref[...] = (jnp.dot(x_ref[...].astype(bf), w_ref[...].astype(bf),
                          preferred_element_type=jnp.float32) + b_ref[...])


# ----------------------------- Pallas wrappers -----------------------------

def _rep_spec(shape):
    # Whole-array block, same block at every grid step (stays resident in VMEM).
    return pl.BlockSpec(shape, lambda b: (0,) * len(shape))


def _split_heads(p, n_heads):
    """Reshape (D,D)/(1,D) attention params into per-head (H,D,dh)/(H,1,dh) form."""
    D = p['wq'].shape[0]
    dh = D // n_heads
    return {
        'wq': p['wq'].reshape(D, n_heads, dh).transpose(1, 0, 2),
        'wk': p['wk'].reshape(D, n_heads, dh).transpose(1, 0, 2),
        'wv': p['wv'].reshape(D, n_heads, dh).transpose(1, 0, 2),
        'wo': p['wo'].reshape(n_heads, dh, D),
        'bq': p['bq'].reshape(n_heads, 1, dh),
        'bk': p['bk'].reshape(n_heads, 1, dh),
        'bv': p['bv'].reshape(n_heads, 1, dh),
        'bo': p['bo'],
    }


def encoder_layer(x, mask, p, n_heads):
    B, S, D = x.shape
    F = p['ff_w1'].shape[1]
    dh = D // n_heads
    a = _split_heads(p['attn'], n_heads)
    kernel = functools.partial(_encoder_layer_kernel, n_heads=n_heads)
    return pl.pallas_call(
        kernel,
        out_shape=jax.ShapeDtypeStruct((B, S, D), jnp.float32),
        grid=(B,),
        in_specs=[
            pl.BlockSpec((1, S, D), lambda b: (b, 0, 0)),
            pl.BlockSpec((1, S, S), lambda b: (b, 0, 0)),
            _rep_spec((n_heads, D, dh)), _rep_spec((n_heads, D, dh)),
            _rep_spec((n_heads, D, dh)), _rep_spec((n_heads, dh, D)),
            _rep_spec((n_heads, 1, dh)), _rep_spec((n_heads, 1, dh)),
            _rep_spec((n_heads, 1, dh)), _rep_spec((1, D)),
            _rep_spec((1, D)), _rep_spec((1, D)),
            _rep_spec((D, F)), _rep_spec((1, F)),
            _rep_spec((F, D)), _rep_spec((1, D)),
            _rep_spec((1, D)), _rep_spec((1, D)),
        ],
        out_specs=pl.BlockSpec((1, S, D), lambda b: (b, 0, 0)),
        compiler_params=pltpu.CompilerParams(dimension_semantics=("parallel",)),
    )(x, mask,
      a['wq'], a['wk'], a['wv'], a['wo'],
      a['bq'], a['bk'], a['bv'], a['bo'],
      p['ln1_g'], p['ln1_b'],
      p['ff_w1'], p['ff_b1'], p['ff_w2'], p['ff_b2'],
      p['ln2_g'], p['ln2_b'])


def decoder_layer(x, x_mask, enc, enc_mask, p, n_heads):
    B, Sq, D = x.shape
    Sk = enc.shape[1]
    F = p['ff_w1'].shape[1]
    dh = D // n_heads
    sa = _split_heads(p['self_attn'], n_heads)
    ca = _split_heads(p['cross_attn'], n_heads)
    kernel = functools.partial(_decoder_layer_kernel, n_heads=n_heads)
    attn_specs = [
        _rep_spec((n_heads, D, dh)), _rep_spec((n_heads, D, dh)),
        _rep_spec((n_heads, D, dh)), _rep_spec((n_heads, dh, D)),
        _rep_spec((n_heads, 1, dh)), _rep_spec((n_heads, 1, dh)),
        _rep_spec((n_heads, 1, dh)), _rep_spec((1, D)),
    ]
    return pl.pallas_call(
        kernel,
        out_shape=jax.ShapeDtypeStruct((B, Sq, D), jnp.float32),
        grid=(B,),
        in_specs=[
            pl.BlockSpec((1, Sq, D), lambda b: (b, 0, 0)),
            pl.BlockSpec((1, Sk, D), lambda b: (b, 0, 0)),
            pl.BlockSpec((1, Sq, Sq), lambda b: (b, 0, 0)),
            pl.BlockSpec((1, Sq, Sk), lambda b: (b, 0, 0)),
        ] + attn_specs + [
            _rep_spec((1, D)), _rep_spec((1, D)),
        ] + attn_specs + [
            _rep_spec((1, D)), _rep_spec((1, D)),
            _rep_spec((D, F)), _rep_spec((1, F)),
            _rep_spec((F, D)), _rep_spec((1, D)),
            _rep_spec((1, D)), _rep_spec((1, D)),
        ],
        out_specs=pl.BlockSpec((1, Sq, D), lambda b: (b, 0, 0)),
        compiler_params=pltpu.CompilerParams(dimension_semantics=("parallel",)),
    )(x, enc, x_mask, enc_mask,
      sa['wq'], sa['wk'], sa['wv'], sa['wo'],
      sa['bq'], sa['bk'], sa['bv'], sa['bo'],
      p['ln1_g'], p['ln1_b'],
      ca['wq'], ca['wk'], ca['wv'], ca['wo'],
      ca['bq'], ca['bk'], ca['bv'], ca['bo'],
      p['ln2_g'], p['ln2_b'],
      p['ff_w1'], p['ff_b1'], p['ff_w2'], p['ff_b2'],
      p['ln3_g'], p['ln3_b'])


def final_linear(x, w, b):
    # Fold batch into rows for a single lane-friendly matmul.
    B, S, D = x.shape
    O = w.shape[1]
    out = pl.pallas_call(
        _final_linear_kernel,
        out_shape=jax.ShapeDtypeStruct((B * S, O), jnp.float32),
    )(x.reshape(B * S, D), w, b)
    return out.reshape(B, S, O)


# ----------------------------- Model (glue + params) -----------------------------

def positional_encoding(max_len, d_model):
    pos = np.arange(max_len, dtype=np.float32)[:, None]
    div = np.exp(np.arange(0, d_model, 2, dtype=np.float32)
                 * (-math.log(10000.0) / d_model))
    pe = np.zeros((max_len, d_model), dtype=np.float32)
    pe[:, 0::2] = np.sin(pos * div)
    pe[:, 1::2] = np.cos(pos * div)
    return jnp.asarray(pe)


def _init_linear(key, fan_in, fan_out):
    kw, kb = jax.random.split(key)
    bound = 1.0 / math.sqrt(fan_in)
    w = jax.random.uniform(kw, (fan_in, fan_out), jnp.float32, -bound, bound)
    b = jax.random.uniform(kb, (1, fan_out), jnp.float32, -bound, bound)
    return w, b


def _init_mha(key, d_model):
    keys = jax.random.split(key, 4)
    p = {}
    for name, k in zip(('q', 'k', 'v', 'o'), keys):
        w, b = _init_linear(k, d_model, d_model)
        p['w' + name] = w
        p['b' + name] = b
    return p


def _init_encoder_layer(key, d_model, d_ff):
    k_attn, k_ff1, k_ff2 = jax.random.split(key, 3)
    w1, b1 = _init_linear(k_ff1, d_model, d_ff)
    w2, b2 = _init_linear(k_ff2, d_ff, d_model)
    return {
        'attn': _init_mha(k_attn, d_model),
        'ln1_g': jnp.ones((1, d_model), jnp.float32),
        'ln1_b': jnp.zeros((1, d_model), jnp.float32),
        'ff_w1': w1, 'ff_b1': b1, 'ff_w2': w2, 'ff_b2': b2,
        'ln2_g': jnp.ones((1, d_model), jnp.float32),
        'ln2_b': jnp.zeros((1, d_model), jnp.float32),
    }


def _init_decoder_layer(key, d_model, d_ff):
    k_sa, k_ca, k_ff1, k_ff2 = jax.random.split(key, 4)
    w1, b1 = _init_linear(k_ff1, d_model, d_ff)
    w2, b2 = _init_linear(k_ff2, d_ff, d_model)
    return {
        'self_attn': _init_mha(k_sa, d_model),
        'ln1_g': jnp.ones((1, d_model), jnp.float32),
        'ln1_b': jnp.zeros((1, d_model), jnp.float32),
        'cross_attn': _init_mha(k_ca, d_model),
        'ln2_g': jnp.ones((1, d_model), jnp.float32),
        'ln2_b': jnp.zeros((1, d_model), jnp.float32),
        'ff_w1': w1, 'ff_b1': b1, 'ff_w2': w2, 'ff_b2': b2,
        'ln3_g': jnp.ones((1, d_model), jnp.float32),
        'ln3_b': jnp.zeros((1, d_model), jnp.float32),
    }


def init_transformer(key, d_model, n_heads, n_layers, d_ff, input_dim, output_dim,
                     max_len=64, decoder_only=False):
    k_emb, k_emb_enc, k_enc, k_dec, k_fc = jax.random.split(key, 5)
    params = {
        'embed': jax.random.normal(k_emb, (input_dim, d_model), jnp.float32),
        'pe': positional_encoding(max_len, d_model),
        'dec_layers': [
            _init_decoder_layer(k, d_model, d_ff)
            for k in jax.random.split(k_dec, n_layers)
        ],
    }
    fc_w, fc_b = _init_linear(k_fc, d_model, output_dim)
    params['fc_w'] = fc_w
    params['fc_b'] = fc_b
    if not decoder_only:
        params['embed_enc'] = jax.random.normal(
            k_emb_enc, (input_dim, d_model), jnp.float32)
        params['enc_layers'] = [
            _init_encoder_layer(k, d_model, d_ff)
            for k in jax.random.split(k_enc, n_layers)
        ]
    return params


def transformer_forward(params, x_ids, x_mask, x_enc_ids=None, x_enc_mask=None,
                        *, n_heads, decoder_only=False):
    if x_enc_ids is not None and decoder_only:
        raise ValueError('x_enc provided but decoder_only is True')
    d_model = params['embed'].shape[1]
    pe = params['pe']
    scale = math.sqrt(d_model)

    enc = None
    if not decoder_only:
        if x_enc_ids is None:
            x_enc_ids = x_ids
        enc = jnp.take(params['embed_enc'], x_enc_ids, axis=0) * scale
        enc = enc + pe[None, :enc.shape[1], :]
        for lp in params['enc_layers']:
            enc = encoder_layer(enc, x_mask, lp, n_heads)

    x = jnp.take(params['embed'], x_ids, axis=0) * scale
    x = x + pe[None, :x.shape[1], :]

    if x_enc_mask is None and enc is not None:
        x_enc_mask = jnp.ones((x.shape[0], x.shape[1], enc.shape[1]), jnp.float32)

    for lp in params['dec_layers']:
        if decoder_only:
            # decoder-only: no cross-attention source -> attend to self for cross too
            x = decoder_layer(x, x_mask, x, x_mask, lp, n_heads)
        else:
            x = decoder_layer(x, x_mask, enc, x_enc_mask, lp, n_heads)

    return final_linear(x, params['fc_w'], params['fc_b'])


# ----------------------------- main -----------------------------

if __name__ == "__main__":
    # Small, deterministic config.
    d_model, n_heads, n_layers, d_ff = 32, 4, 2, 64
    input_dim, output_dim = 16, 10          # vocab size / output classes
    B, S = 2, 8

    key = jax.random.PRNGKey(0)
    k_params, k_x, k_xenc = jax.random.split(key, 3)

    params = init_transformer(k_params, d_model, n_heads, n_layers, d_ff,
                              input_dim, output_dim, max_len=64,
                              decoder_only=False)

    x_ids = jax.random.randint(k_x, (B, S), 0, input_dim, dtype=jnp.int32)
    x_enc_ids = jax.random.randint(k_xenc, (B, S), 0, input_dim, dtype=jnp.int32)

    # x_mask: causal mask (applied to encoder & decoder self-attention, as the
    # reference forward passes the same x_mask to both); x_enc_mask: all ones.
    causal = jnp.tril(jnp.ones((S, S), jnp.float32))
    x_mask = jnp.broadcast_to(causal, (B, S, S))
    x_enc_mask = jnp.ones((B, S, S), jnp.float32)

    out = transformer_forward(params, x_ids, x_mask,
                              x_enc_ids=x_enc_ids, x_enc_mask=x_enc_mask,
                              n_heads=n_heads, decoder_only=False)
    out = jax.block_until_ready(out)
    assert out.shape == (B, S, output_dim), out.shape
    assert bool(jnp.all(jnp.isfinite(out)))
    print("KERNEL_OK")
</pallas_src>

<mosaic_0001>
module attributes {stable_mosaic.version = 11 : i64} {
  func.func @_encoder_layer_kernel(%arg0: i32, %arg1: memref<1x8x32xf32, #tpu.memory_space<vmem>>, %arg2: memref<1x8x8xf32, #tpu.memory_space<vmem>>, %arg3: memref<4x32x8xf32, #tpu.memory_space<vmem>>, %arg4: memref<4x32x8xf32, #tpu.memory_space<vmem>>, %arg5: memref<4x32x8xf32, #tpu.memory_space<vmem>>, %arg6: memref<4x8x32xf32, #tpu.memory_space<vmem>>, %arg7: memref<4x1x8xf32, #tpu.memory_space<vmem>>, %arg8: memref<4x1x8xf32, #tpu.memory_space<vmem>>, %arg9: memref<4x1x8xf32, #tpu.memory_space<vmem>>, %arg10: memref<1x32xf32, #tpu.memory_space<vmem>>, %arg11: memref<1x32xf32, #tpu.memory_space<vmem>>, %arg12: memref<1x32xf32, #tpu.memory_space<vmem>>, %arg13: memref<32x64xf32, #tpu.memory_space<vmem>>, %arg14: memref<1x64xf32, #tpu.memory_space<vmem>>, %arg15: memref<64x32xf32, #tpu.memory_space<vmem>>, %arg16: memref<1x32xf32, #tpu.memory_space<vmem>>, %arg17: memref<1x32xf32, #tpu.memory_space<vmem>>, %arg18: memref<1x32xf32, #tpu.memory_space<vmem>>, %arg19: memref<1x8x32xf32, #tpu.memory_space<vmem>>) attributes {dimension_semantics = [#tpu.dimension_semantics<parallel>], iteration_bounds = array<i64: 2>, scalar_prefetch = 0 : i64, scratch_operands = 0 : i64, tpu.core_type = #tpu.core_type<tc>, window_params = [{transform_indices = @transform_0, window_bounds = array<i64: 1, 8, 32>}, {transform_indices = @transform_1, window_bounds = array<i64: 1, 8, 8>}, {pipeline_mode = #tpu.pipeline_mode<synchronous>, transform_indices = @transform_2, window_bounds = array<i64: 4, 32, 8>}, {pipeline_mode = #tpu.pipeline_mode<synchronous>, transform_indices = @transform_3, window_bounds = array<i64: 4, 32, 8>}, {pipeline_mode = #tpu.pipeline_mode<synchronous>, transform_indices = @transform_4, window_bounds = array<i64: 4, 32, 8>}, {pipeline_mode = #tpu.pipeline_mode<synchronous>, transform_indices = @transform_5, window_bounds = array<i64: 4, 8, 32>}, {pipeline_mode = #tpu.pipeline_mode<synchronous>, transform_indices = @transform_6, window_bounds = array<i64: 4, 1, 8>}, {pipeline_mode = #tpu.pipeline_mode<synchronous>, transform_indices = @transform_7, window_bounds = array<i64: 4, 1, 8>}, {pipeline_mode = #tpu.pipeline_mode<synchronous>, transform_indices = @transform_8, window_bounds = array<i64: 4, 1, 8>}, {pipeline_mode = #tpu.pipeline_mode<synchronous>, transform_indices = @transform_9, window_bounds = array<i64: 1, 32>}, {pipeline_mode = #tpu.pipeline_mode<synchronous>, transform_indices = @transform_10, window_bounds = array<i64: 1, 32>}, {pipeline_mode = #tpu.pipeline_mode<synchronous>, transform_indices = @transform_11, window_bounds = array<i64: 1, 32>}, {pipeline_mode = #tpu.pipeline_mode<synchronous>, transform_indices = @transform_12, window_bounds = array<i64: 32, 64>}, {pipeline_mode = #tpu.pipeline_mode<synchronous>, transform_indices = @transform_13, window_bounds = array<i64: 1, 64>}, {pipeline_mode = #tpu.pipeline_mode<synchronous>, transform_indices = @transform_14, window_bounds = array<i64: 64, 32>}, {pipeline_mode = #tpu.pipeline_mode<synchronous>, transform_indices = @transform_15, window_bounds = array<i64: 1, 32>}, {pipeline_mode = #tpu.pipeline_mode<synchronous>, transform_indices = @transform_16, window_bounds = array<i64: 1, 32>}, {pipeline_mode = #tpu.pipeline_mode<synchronous>, transform_indices = @transform_17, window_bounds = array<i64: 1, 32>}, {transform_indices = @transform_18, window_bounds = array<i64: 1, 8, 32>}]} {
    %c0 = arith.constant 0 : index
    %c0_0 = arith.constant 0 : index
    %c0_1 = arith.constant 0 : index
    %0 = vector.load %arg1[%c0, %c0_0, %c0_1] : memref<1x8x32xf32, #tpu.memory_space<vmem>>, vector<1x8x32xf32>
    %1 = vector.shape_cast %0 : vector<1x8x32xf32> to vector<8x32xf32>
    %c0_2 = arith.constant 0 : index
    %c0_3 = arith.constant 0 : index
    %c0_4 = arith.constant 0 : index
    %2 = vector.load %arg2[%c0_2, %c0_3, %c0_4] : memref<1x8x8xf32, #tpu.memory_space<vmem>>, vector<1x8x8xf32>
    %3 = vector.shape_cast %2 : vector<1x8x8xf32> to vector<8x8xf32>
    %c0_5 = arith.constant 0 : index
    %c0_6 = arith.constant 0 : index
    %c0_7 = arith.constant 0 : index
    %4 = vector.load %arg3[%c0_5, %c0_6, %c0_7] : memref<4x32x8xf32, #tpu.memory_space<vmem>>, vector<4x32x8xf32>
    %c0_8 = arith.constant 0 : index
    %c0_9 = arith.constant 0 : index
    %c0_10 = arith.constant 0 : index
    %5 = vector.load %arg4[%c0_8, %c0_9, %c0_10] : memref<4x32x8xf32, #tpu.memory_space<vmem>>, vector<4x32x8xf32>
    %c0_11 = arith.constant 0 : index
    %c0_12 = arith.constant 0 : index
    %c0_13 = arith.constant 0 : index
    %6 = vector.load %arg5[%c0_11, %c0_12, %c0_13] : memref<4x32x8xf32, #tpu.memory_space<vmem>>, vector<4x32x8xf32>
    %c0_14 = arith.constant 0 : index
    %c0_15 = arith.constant 0 : index
    %c0_16 = arith.constant 0 : index
    %7 = vector.load %arg6[%c0_14, %c0_15, %c0_16] : memref<4x8x32xf32, #tpu.memory_space<vmem>>, vector<4x8x32xf32>
    %c0_17 = arith.constant 0 : index
    %c0_18 = arith.constant 0 : index
    %c0_19 = arith.constant 0 : index
    %8 = vector.load %arg7[%c0_17, %c0_18, %c0_19] : memref<4x1x8xf32, #tpu.memory_space<vmem>>, vector<4x1x8xf32>
    %c0_20 = arith.constant 0 : index
    %c0_21 = arith.constant 0 : index
    %c0_22 = arith.constant 0 : index
    %9 = vector.load %arg8[%c0_20, %c0_21, %c0_22] : memref<4x1x8xf32, #tpu.memory_space<vmem>>, vector<4x1x8xf32>
    %c0_23 = arith.constant 0 : index
    %c0_24 = arith.constant 0 : index
    %c0_25 = arith.constant 0 : index
    %10 = vector.load %arg9[%c0_23, %c0_24, %c0_25] : memref<4x1x8xf32, #tpu.memory_space<vmem>>, vector<4x1x8xf32>
    %c0_26 = arith.constant 0 : index
    %c0_27 = arith.constant 0 : index
    %11 = vector.load %arg10[%c0_26, %c0_27] : memref<1x32xf32, #tpu.memory_space<vmem>>, vector<1x32xf32>
    %12 = arith.truncf %1 : vector<8x32xf32> to vector<8x32xbf16>
    %13 = vector.shape_cast %12 : vector<8x32xbf16> to vector<1x8x32xbf16>
    %14 = vector.shape_cast %13 : vector<1x8x32xbf16> to vector<1x8x32xbf16>
    %15 = vector.broadcast %14 : vector<1x8x32xbf16> to vector<4x8x32xbf16>
    %16 = arith.truncf %1 : vector<8x32xf32> to vector<8x32xbf16>
    %17 = vector.shape_cast %16 : vector<8x32xbf16> to vector<1x8x32xbf16>
    %18 = vector.shape_cast %17 : vector<1x8x32xbf16> to vector<1x8x32xbf16>
    %19 = vector.broadcast %18 : vector<1x8x32xbf16> to vector<4x8x32xbf16>
    %20 = arith.truncf %4 : vector<4x32x8xf32> to vector<4x32x8xbf16>
    "tpu.trace_start"() <{level = 10 : i32, message = "hsd,hdk->hsk"}> : () -> ()
    %cst = arith.constant dense<0.000000e+00> : vector<4x8x8xf32>
    %21 = tpu.matmul %15, %20, %cst {dimension_numbers = #tpu.dot_dimension_numbers<[2], [1], [1], [2], [0, 0, 0, 1, 1, 2], [0], [0]>} : vector<4x8x32xbf16>, vector<4x32x8xbf16>, vector<4x8x8xf32> -> vector<4x8x8xf32>
    "tpu.trace_stop"() : () -> ()
    %22 = vector.broadcast %8 : vector<4x1x8xf32> to vector<4x8x8xf32>
    %23 = arith.addf %21, %22 : vector<4x8x8xf32>
    %24 = arith.truncf %5 : vector<4x32x8xf32> to vector<4x32x8xbf16>
    "tpu.trace_start"() <{level = 10 : i32, message = "hsd,hdk->hsk"}> : () -> ()
    %cst_28 = arith.constant dense<0.000000e+00> : vector<4x8x8xf32>
    %25 = tpu.matmul %19, %24, %cst_28 {dimension_numbers = #tpu.dot_dimension_numbers<[2], [1], [1], [2], [0, 0, 0, 1, 1, 2], [0], [0]>} : vector<4x8x32xbf16>, vector<4x32x8xbf16>, vector<4x8x8xf32> -> vector<4x8x8xf32>
    "tpu.trace_stop"() : () -> ()
    %26 = vector.broadcast %9 : vector<4x1x8xf32> to vector<4x8x8xf32>
    %27 = arith.addf %25, %26 : vector<4x8x8xf32>
    %28 = arith.truncf %6 : vector<4x32x8xf32> to vector<4x32x8xbf16>
    "tpu.trace_start"() <{level = 10 : i32, message = "hsd,hdk->hsk"}> : () -> ()
    %cst_29 = arith.constant dense<0.000000e+00> : vector<4x8x8xf32>
    %29 = tpu.matmul %19, %28, %cst_29 {dimension_numbers = #tpu.dot_dimension_numbers<[2], [1], [1], [2], [0, 0, 0, 1, 1, 2], [0], [0]>} : vector<4x8x32xbf16>, vector<4x32x8xbf16>, vector<4x8x8xf32> -> vector<4x8x8xf32>
    "tpu.trace_stop"() : () -> ()
    %30 = vector.broadcast %10 : vector<4x1x8xf32> to vector<4x8x8xf32>
    %31 = arith.addf %29, %30 : vector<4x8x8xf32>
    %32 = arith.truncf %23 : vector<4x8x8xf32> to vector<4x8x8xbf16>
    %33 = arith.truncf %27 : vector<4x8x8xf32> to vector<4x8x8xbf16>
    "tpu.trace_start"() <{level = 10 : i32, message = "hqe,hke->hqk"}> : () -> ()
    %cst_30 = arith.constant dense<0.000000e+00> : vector<4x8x8xf32>
    %34 = tpu.matmul %32, %33, %cst_30 {dimension_numbers = #tpu.dot_dimension_numbers<[2], [2], [1], [1], [0, 0, 0, 1, 1, 1], [0], [0]>} : vector<4x8x8xbf16>, vector<4x8x8xbf16>, vector<4x8x8xf32> -> vector<4x8x8xf32>
    "tpu.trace_stop"() : () -> ()
    %cst_31 = arith.constant 0.353553385 : f32
    %35 = vector.broadcast %cst_31 : f32 to vector<4x8x8xf32>
    %36 = arith.mulf %34, %35 : vector<4x8x8xf32>
    %37 = vector.shape_cast %3 : vector<8x8xf32> to vector<1x8x8xf32>
    %cst_32 = arith.constant 5.000000e-01 : f32
    %38 = vector.broadcast %cst_32 : f32 to vector<1x8x8xf32>
    %39 = arith.cmpf ogt, %37, %38 : vector<1x8x8xf32>
    %cst_33 = arith.constant -1.000000e+09 : f32
    %40 = vector.shape_cast %39 : vector<1x8x8xi1> to vector<1x8x8xi1>
    %41 = vector.broadcast %40 : vector<1x8x8xi1> to vector<4x8x8xi1>
    %42 = vector.broadcast %cst_33 : f32 to vector<4x8x8xf32>
    %43 = arith.select %41, %36, %42 : vector<4x8x8xi1>, vector<4x8x8xf32>
    %cst_34 = arith.constant dense<0xFF800000> : vector<4x8xf32>
    %44 = vector.multi_reduction <maximumf>, %43, %cst_34 [2] : vector<4x8x8xf32> to vector<4x8xf32>
    %45 = vector.shape_cast %44 : vector<4x8xf32> to vector<4x8x1xf32>
    %46 = vector.broadcast %45 : vector<4x8x1xf32> to vector<4x8x8xf32>
    %47 = arith.subf %43, %46 : vector<4x8x8xf32>
    %48 = math.exp %47 : vector<4x8x8xf32>
    %cst_35 = arith.constant dense<0.000000e+00> : vector<4x8xf32>
    %49 = vector.multi_reduction <add>, %48, %cst_35 [2] : vector<4x8x8xf32> to vector<4x8xf32>
    %50 = vector.shape_cast %49 : vector<4x8xf32> to vector<4x8x1xf32>
    %51 = tpu.reciprocal %50 {approx = true} : vector<4x8x1xf32> -> vector<4x8x1xf32>
    %52 = vector.broadcast %51 : vector<4x8x1xf32> to vector<4x8x8xf32>
    %53 = arith.mulf %48, %52 : vector<4x8x8xf32>
    %54 = arith.truncf %53 : vector<4x8x8xf32> to vector<4x8x8xbf16>
    %55 = arith.truncf %31 : vector<4x8x8xf32> to vector<4x8x8xbf16>
    "tpu.trace_start"() <{level = 10 : i32, message = "hqk,hke->hqe"}> : () -> ()
    %cst_36 = arith.constant dense<0.000000e+00> : vector<4x8x8xf32>
    %56 = tpu.matmul %54, %55, %cst_36 {dimension_numbers = #tpu.dot_dimension_numbers<[2], [1], [1], [2], [0, 0, 0, 1, 1, 2], [0], [0]>} : vector<4x8x8xbf16>, vector<4x8x8xbf16>, vector<4x8x8xf32> -> vector<4x8x8xf32>
    "tpu.trace_stop"() : () -> ()
    %57 = arith.truncf %56 : vector<4x8x8xf32> to vector<4x8x8xbf16>
    %58 = arith.truncf %7 : vector<4x8x32xf32> to vector<4x8x32xbf16>
    "tpu.trace_start"() <{level = 10 : i32, message = "hqe,hed->hqd"}> : () -> ()
    %cst_37 = arith.constant dense<0.000000e+00> : vector<4x8x32xf32>
    %59 = tpu.matmul %57, %58, %cst_37 {dimension_numbers = #tpu.dot_dimension_numbers<[2], [1], [1], [2], [0, 0, 0, 1, 1, 2], [0], [0]>} : vector<4x8x8xbf16>, vector<4x8x32xbf16>, vector<4x8x32xf32> -> vector<4x8x32xf32>
    "tpu.trace_stop"() : () -> ()
    %cst_38 = arith.constant dense<0.000000e+00> : vector<8x32xf32>
    %60 = vector.multi_reduction <add>, %59, %cst_38 [0] : vector<4x8x32xf32> to vector<8x32xf32>
    %61 = vector.broadcast %11 : vector<1x32xf32> to vector<8x32xf32>
    %62 = arith.addf %60, %61 : vector<8x32xf32>
    %c0_39 = arith.constant 0 : index
    %c0_40 = arith.constant 0 : index
    %63 = vector.load %arg11[%c0_39, %c0_40] : memref<1x32xf32, #tpu.memory_space<vmem>>, vector<1x32xf32>
    %c0_41 = arith.constant 0 : index
    %c0_42 = arith.constant 0 : index
    %64 = vector.load %arg12[%c0_41, %c0_42] : memref<1x32xf32, #tpu.memory_space<vmem>>, vector<1x32xf32>
    %65 = arith.addf %1, %62 : vector<8x32xf32>
    %cst_43 = arith.constant dense<0.000000e+00> : vector<8xf32>
    %66 = vector.multi_reduction <add>, %65, %cst_43 [1] : vector<8x32xf32> to vector<8xf32>
    %67 = vector.shape_cast %66 : vector<8xf32> to vector<8x1xf32>
    %cst_44 = arith.constant 3.200000e+01 : f32
    %68 = vector.broadcast %cst_44 : f32 to vector<8x1xf32>
    %69 = arith.divf %67, %68 : vector<8x1xf32>
    %70 = vector.broadcast %69 : vector<8x1xf32> to vector<8x32xf32>
    %71 = arith.subf %65, %70 : vector<8x32xf32>
    %72 = arith.mulf %71, %71 : vector<8x32xf32>
    %cst_45 = arith.constant dense<0.000000e+00> : vector<8xf32>
    %73 = vector.multi_reduction <add>, %72, %cst_45 [1] : vector<8x32xf32> to vector<8xf32>
    %74 = vector.shape_cast %73 : vector<8xf32> to vector<8x1xf32>
    %cst_46 = arith.constant 3.200000e+01 : f32
    %75 = vector.broadcast %cst_46 : f32 to vector<8x1xf32>
    %76 = arith.divf %74, %75 : vector<8x1xf32>
    %77 = vector.broadcast %69 : vector<8x1xf32> to vector<8x32xf32>
    %78 = arith.subf %65, %77 : vector<8x32xf32>
    %cst_47 = arith.constant 9.99999974E-6 : f32
    %79 = vector.broadcast %cst_47 : f32 to vector<8x1xf32>
    %80 = arith.addf %76, %79 : vector<8x1xf32>
    %81 = math.rsqrt %80 : vector<8x1xf32>
    %82 = vector.broadcast %81 : vector<8x1xf32> to vector<8x32xf32>
    %83 = arith.mulf %78, %82 : vector<8x32xf32>
    %84 = vector.broadcast %63 : vector<1x32xf32> to vector<8x32xf32>
    %85 = arith.mulf %83, %84 : vector<8x32xf32>
    %86 = vector.broadcast %64 : vector<1x32xf32> to vector<8x32xf32>
    %87 = arith.addf %85, %86 : vector<8x32xf32>
    %c0_48 = arith.constant 0 : index
    %c0_49 = arith.constant 0 : index
    %88 = vector.load %arg13[%c0_48, %c0_49] : memref<32x64xf32, #tpu.memory_space<vmem>>, vector<32x64xf32>
    %c0_50 = arith.constant 0 : index
    %c0_51 = arith.constant 0 : index
    %89 = vector.load %arg14[%c0_50, %c0_51] : memref<1x64xf32, #tpu.memory_space<vmem>>, vector<1x64xf32>
    %c0_52 = arith.constant 0 : index
    %c0_53 = arith.constant 0 : index
    %90 = vector.load %arg15[%c0_52, %c0_53] : memref<64x32xf32, #tpu.memory_space<vmem>>, vector<64x32xf32>
    %c0_54 = arith.constant 0 : index
    %c0_55 = arith.constant 0 : index
    %91 = vector.load %arg16[%c0_54, %c0_55] : memref<1x32xf32, #tpu.memory_space<vmem>>, vector<1x32xf32>
    %92 = arith.truncf %87 : vector<8x32xf32> to vector<8x32xbf16>
    %93 = arith.truncf %88 : vector<32x64xf32> to vector<32x64xbf16>
    %cst_56 = arith.constant dense<0.000000e+00> : vector<8x64xf32>
    %94 = tpu.matmul %92, %93, %cst_56 {dimension_numbers = #tpu.dot_dimension_numbers<[1], [0], [0], [1], [0, 0, 1, 1], [], []>} : vector<8x32xbf16>, vector<32x64xbf16>, vector<8x64xf32> -> vector<8x64xf32>
    %95 = vector.broadcast %89 : vector<1x64xf32> to vector<8x64xf32>
    %96 = arith.addf %94, %95 : vector<8x64xf32>
    %cst_57 = arith.constant 0.000000e+00 : f32
    %97 = vector.broadcast %cst_57 : f32 to vector<8x64xf32>
    %98 = arith.maximumf %96, %97 : vector<8x64xf32>
    %99 = arith.truncf %98 : vector<8x64xf32> to vector<8x64xbf16>
    %100 = arith.truncf %90 : vector<64x32xf32> to vector<64x32xbf16>
    %cst_58 = arith.constant dense<0.000000e+00> : vector<8x32xf32>
    %101 = tpu.matmul %99, %100, %cst_58 {dimension_numbers = #tpu.dot_dimension_numbers<[1], [0], [0], [1], [0, 0, 1, 1], [], []>} : vector<8x64xbf16>, vector<64x32xbf16>, vector<8x32xf32> -> vector<8x32xf32>
    %102 = vector.broadcast %91 : vector<1x32xf32> to vector<8x32xf32>
    %103 = arith.addf %101, %102 : vector<8x32xf32>
    %c0_59 = arith.constant 0 : index
    %c0_60 = arith.constant 0 : index
    %104 = vector.load %arg17[%c0_59, %c0_60] : memref<1x32xf32, #tpu.memory_space<vmem>>, vector<1x32xf32>
    %c0_61 = arith.constant 0 : index
    %c0_62 = arith.constant 0 : index
    %105 = vector.load %arg18[%c0_61, %c0_62] : memref<1x32xf32, #tpu.memory_space<vmem>>, vector<1x32xf32>
    %106 = arith.addf %87, %103 : vector<8x32xf32>
    %cst_63 = arith.constant dense<0.000000e+00> : vector<8xf32>
    %107 = vector.multi_reduction <add>, %106, %cst_63 [1] : vector<8x32xf32> to vector<8xf32>
    %108 = vector.shape_cast %107 : vector<8xf32> to vector<8x1xf32>
    %cst_64 = arith.constant 3.200000e+01 : f32
    %109 = vector.broadcast %cst_64 : f32 to vector<8x1xf32>
    %110 = arith.divf %108, %109 : vector<8x1xf32>
    %111 = vector.broadcast %110 : vector<8x1xf32> to vector<8x32xf32>
    %112 = arith.subf %106, %111 : vector<8x32xf32>
    %113 = arith.mulf %112, %112 : vector<8x32xf32>
    %cst_65 = arith.constant dense<0.000000e+00> : vector<8xf32>
    %114 = vector.multi_reduction <add>, %113, %cst_65 [1] : vector<8x32xf32> to vector<8xf32>
    %115 = vector.shape_cast %114 : vector<8xf32> to vector<8x1xf32>
    %cst_66 = arith.constant 3.200000e+01 : f32
    %116 = vector.broadcast %cst_66 : f32 to vector<8x1xf32>
    %117 = arith.divf %115, %116 : vector<8x1xf32>
    %118 = vector.broadcast %110 : vector<8x1xf32> to vector<8x32xf32>
    %119 = arith.subf %106, %118 : vector<8x32xf32>
    %cst_67 = arith.constant 9.99999974E-6 : f32
    %120 = vector.broadcast %cst_67 : f32 to vector<8x1xf32>
    %121 = arith.addf %117, %120 : vector<8x1xf32>
    %122 = math.rsqrt %121 : vector<8x1xf32>
    %123 = vector.broadcast %122 : vector<8x1xf32> to vector<8x32xf32>
    %124 = arith.mulf %119, %123 : vector<8x32xf32>
    %125 = vector.broadcast %104 : vector<1x32xf32> to vector<8x32xf32>
    %126 = arith.mulf %124, %125 : vector<8x32xf32>
    %127 = vector.broadcast %105 : vector<1x32xf32> to vector<8x32xf32>
    %128 = arith.addf %126, %127 : vector<8x32xf32>
    %c0_68 = arith.constant 0 : index
    %c0_69 = arith.constant 0 : index
    %c0_70 = arith.constant 0 : index
    %129 = vector.load %arg19[%c0_68, %c0_69, %c0_70] : memref<1x8x32xf32, #tpu.memory_space<vmem>>, vector<1x8x32xf32>
    %130 = vector.shape_cast %129 : vector<1x8x32xf32> to vector<8x32xf32>
    %131 = vector.shape_cast %128 : vector<8x32xf32> to vector<1x8x32xf32>
    tpu.vector_store %arg19[%c0_68, %c0_69, %c0_70], %131 {strides = array<i32>} : memref<1x8x32xf32, #tpu.memory_space<vmem>>, vector<1x8x32xf32>,
    return
  }
  func.func @transform_0(%arg0: i32) -> (i32, i32, i32) {
    %c0_i32 = arith.constant 0 : i32
    %c0_i32_0 = arith.constant 0 : i32
    %c0_i32_1 = arith.constant 0 : i32
    return %arg0, %c0_i32, %c0_i32_0 : i32, i32, i32
  }
  func.func @transform_1(%arg0: i32) -> (i32, i32, i32) {
    %c0_i32 = arith.constant 0 : i32
    %c0_i32_0 = arith.constant 0 : i32
    %c0_i32_1 = arith.constant 0 : i32
    return %arg0, %c0_i32, %c0_i32_0 : i32, i32, i32
  }
  func.func @transform_2(%arg0: i32) -> (i32, i32, i32) {
    %c0_i32 = arith.constant 0 : i32
    %c0_i32_0 = arith.constant 0 : i32
    %c0_i32_1 = arith.constant 0 : i32
    %c0_i32_2 = arith.constant 0 : i32
    return %c0_i32, %c0_i32_0, %c0_i32_1 : i32, i32, i32
  }
  func.func @transform_3(%arg0: i32) -> (i32, i32, i32) {
    %c0_i32 = arith.constant 0 : i32
    %c0_i32_0 = arith.constant 0 : i32
    %c0_i32_1 = arith.constant 0 : i32
    %c0_i32_2 = arith.constant 0 : i32
    return %c0_i32, %c0_i32_0, %c0_i32_1 : i32, i32, i32
  }
  func.func @transform_4(%arg0: i32) -> (i32, i32, i32) {
    %c0_i32 = arith.constant 0 : i32
    %c0_i32_0 = arith.constant 0 : i32
    %c0_i32_1 = arith.constant 0 : i32
    %c0_i32_2 = arith.constant 0 : i32
    return %c0_i32, %c0_i32_0, %c0_i32_1 : i32, i32, i32
  }
  func.func @transform_5(%arg0: i32) -> (i32, i32, i32) {
    %c0_i32 = arith.constant 0 : i32
    %c0_i32_0 = arith.constant 0 : i32
    %c0_i32_1 = arith.constant 0 : i32
    %c0_i32_2 = arith.constant 0 : i32
    return %c0_i32, %c0_i32_0, %c0_i32_1 : i32, i32, i32
  }
  func.func @transform_6(%arg0: i32) -> (i32, i32, i32) {
    %c0_i32 = arith.constant 0 : i32
    %c0_i32_0 = arith.constant 0 : i32
    %c0_i32_1 = arith.constant 0 : i32
    %c0_i32_2 = arith.constant 0 : i32
    return %c0_i32, %c0_i32_0, %c0_i32_1 : i32, i32, i32
  }
  func.func @transform_7(%arg0: i32) -> (i32, i32, i32) {
    %c0_i32 = arith.constant 0 : i32
    %c0_i32_0 = arith.constant 0 : i32
    %c0_i32_1 = arith.constant 0 : i32
    %c0_i32_2 = arith.constant 0 : i32
    return %c0_i32, %c0_i32_0, %c0_i32_1 : i32, i32, i32
  }
  func.func @transform_8(%arg0: i32) -> (i32, i32, i32) {
    %c0_i32 = arith.constant 0 : i32
    %c0_i32_0 = arith.constant 0 : i32
    %c0_i32_1 = arith.constant 0 : i32
    %c0_i32_2 = arith.constant 0 : i32
    return %c0_i32, %c0_i32_0, %c0_i32_1 : i32, i32, i32
  }
  func.func @transform_9(%arg0: i32) -> (i32, i32) {
    %c0_i32 = arith.constant 0 : i32
    %c0_i32_0 = arith.constant 0 : i32
    %c0_i32_1 = arith.constant 0 : i32
    return %c0_i32, %c0_i32_0 : i32, i32
  }
  func.func @transform_10(%arg0: i32) -> (i32, i32) {
    %c0_i32 = arith.constant 0 : i32
    %c0_i32_0 = arith.constant 0 : i32
    %c0_i32_1 = arith.constant 0 : i32
    return %c0_i32, %c0_i32_0 : i32, i32
  }
  func.func @transform_11(%arg0: i32) -> (i32, i32) {
    %c0_i32 = arith.constant 0 : i32
    %c0_i32_0 = arith.constant 0 : i32
    %c0_i32_1 = arith.constant 0 : i32
    return %c0_i32, %c0_i32_0 : i32, i32
  }
  func.func @transform_12(%arg0: i32) -> (i32, i32) {
    %c0_i32 = arith.constant 0 : i32
    %c0_i32_0 = arith.constant 0 : i32
    %c0_i32_1 = arith.constant 0 : i32
    return %c0_i32, %c0_i32_0 : i32, i32
  }
  func.func @transform_13(%arg0: i32) -> (i32, i32) {
    %c0_i32 = arith.constant 0 : i32
    %c0_i32_0 = arith.constant 0 : i32
    %c0_i32_1 = arith.constant 0 : i32
    return %c0_i32, %c0_i32_0 : i32, i32
  }
  func.func @transform_14(%arg0: i32) -> (i32, i32) {
    %c0_i32 = arith.constant 0 : i32
    %c0_i32_0 = arith.constant 0 : i32
    %c0_i32_1 = arith.constant 0 : i32
    return %c0_i32, %c0_i32_0 : i32, i32
  }
  func.func @transform_15(%arg0: i32) -> (i32, i32) {
    %c0_i32 = arith.constant 0 : i32
    %c0_i32_0 = arith.constant 0 : i32
    %c0_i32_1 = arith.constant 0 : i32
    return %c0_i32, %c0_i32_0 : i32, i32
  }
  func.func @transform_16(%arg0: i32) -> (i32, i32) {
    %c0_i32 = arith.constant 0 : i32
    %c0_i32_0 = arith.constant 0 : i32
    %c0_i32_1 = arith.constant 0 : i32
    return %c0_i32, %c0_i32_0 : i32, i32
  }
  func.func @transform_17(%arg0: i32) -> (i32, i32) {
    %c0_i32 = arith.constant 0 : i32
    %c0_i32_0 = arith.constant 0 : i32
    %c0_i32_1 = arith.constant 0 : i32
    return %c0_i32, %c0_i32_0 : i32, i32
  }
  func.func @transform_18(%arg0: i32) -> (i32, i32, i32) {
    %c0_i32 = arith.constant 0 : i32
    %c0_i32_0 = arith.constant 0 : i32
    %c0_i32_1 = arith.constant 0 : i32
    return %arg0, %c0_i32, %c0_i32_0 : i32, i32, i32
  }
}

</mosaic_0001>

<llo_original>
// kernel: tpu_custom_call.1
$region0: #{tpu_custom_call.1}
  #allocation0 [shape = 'u32[]', space=smem, size = 0x4, offset = 0x4, fixed_abs, tag = 'smem constant byte address 0x4 - core index']
  #allocation1 [shape = 'u32[144,128]{1,0:T(1,128)}', space=vmem, size = 0x12000, scoped, tag = 'internal scratch']
  %s0 = inlined_call_operand.vmem [shape: f32[2,8,32], index: 0, kind: input, shape index: {}]
  %s1 = inlined_call_operand.vmem [shape: f32[2,8,8], index: 1, kind: input, shape index: {}]
  %s2 = inlined_call_operand.vmem [shape: f32[4,32,8], index: 2, kind: input, shape index: {}]
  %s3 = inlined_call_operand.vmem [shape: f32[4,32,8], index: 3, kind: input, shape index: {}]
  %s4 = inlined_call_operand.vmem [shape: f32[4,32,8], index: 4, kind: input, shape index: {}]
  %s5 = inlined_call_operand.vmem [shape: f32[4,8,32], index: 5, kind: input, shape index: {}]
  %s6 = inlined_call_operand.vmem [shape: f32[4,1,8], index: 6, kind: input, shape index: {}]
  %s7 = inlined_call_operand.vmem [shape: f32[4,1,8], index: 7, kind: input, shape index: {}]
  %s8 = inlined_call_operand.vmem [shape: f32[4,1,8], index: 8, kind: input, shape index: {}]
  %s9 = inlined_call_operand.vmem [shape: f32[1,32], index: 9, kind: input, shape index: {}]
  %s10 = inlined_call_operand.vmem [shape: f32[1,32], index: 10, kind: input, shape index: {}]
  %s11 = inlined_call_operand.vmem [shape: f32[1,32], index: 11, kind: input, shape index: {}]
  %s12 = inlined_call_operand.vmem [shape: f32[32,64], index: 12, kind: input, shape index: {}]
  %s13 = inlined_call_operand.vmem [shape: f32[1,64], index: 13, kind: input, shape index: {}]
  %s14 = inlined_call_operand.vmem [shape: f32[64,32], index: 14, kind: input, shape index: {}]
  %s15 = inlined_call_operand.vmem [shape: f32[1,32], index: 15, kind: input, shape index: {}]
  %s16 = inlined_call_operand.vmem [shape: f32[1,32], index: 16, kind: input, shape index: {}]
  %s17 = inlined_call_operand.vmem [shape: f32[1,32], index: 17, kind: input, shape index: {}]
  %s18 = inlined_call_operand.hbm [shape: f32[2,8,32], index: 18, kind: output, shape index: {}]
  %s19 = sld [smem:[#allocation0]]
  $region105: #{tpu_custom_call.1} parent=0
    _
  %s21 = ssub.s32 1, %s19
  %s22 = scalar_select 0, %s21, %s19
  $region1: #{tpu_custom_call.1} parent=0
    #allocation2 [shape = 'u8[8192]{0}', space=vmem, size = 0x2000, scoped, tag = 'output window, operand 0']
    #allocation3 [shape = 's32[2]{0}', space=sflag, size = 0x8, scoped, tag = 'scoped memory for tpu_custom_call.1']
    %23 = vsyncpa [#allocation3], 0
    %s24 = scalar_lea.sflag [#allocation3], 1
    %25 = vsyncpa %s24, 0
    loop: start=0, step=1, limit=4
    $region2: #{tpu_custom_call.1} parent=1 // loop_pre_header
      _
    $region3: #{tpu_custom_call.1} parent=1 // loop_header
      %s27 = sphi 0, %s31
      %p28 = scmp.ge.s32.totalorder %s27, 4
      %s37 = sphi 0, %s39
      %s40 = sphi 0, %s37
      %s41 = sphi 0, %s40
      %s57 = sphi 0, %s41
      %s63 = sphi 0, %s65
      %s66 = sphi 0, %s63
      %s67 = sphi 0, %s66
      %s83 = sphi 0, %s67
      %s87 = sphi 0, %s87
      %s89 = sphi 0, %s87
      %s90 = sphi 0, %s89
      %s104 = sphi 0, %s90
      %s108 = sphi 0, %s108
      %s110 = sphi 0, %s108
      %s111 = sphi 0, %s110
      %s125 = sphi 0, %s111
      %s129 = sphi 0, %s129
      %s131 = sphi 0, %s129
      %s132 = sphi 0, %s131
      %s146 = sphi 0, %s132
      %s150 = sphi 0, %s150
      %s152 = sphi 0, %s150
      %s153 = sphi 0, %s152
      %s167 = sphi 0, %s153
      %s171 = sphi 0, %s171
      %s173 = sphi 0, %s171
      %s174 = sphi 0, %s173
      %s188 = sphi 0, %s174
      %s192 = sphi 0, %s192
      %s194 = sphi 0, %s192
      %s195 = sphi 0, %s194
      %s209 = sphi 0, %s195
      %s213 = sphi 0, %s213
      %s215 = sphi 0, %s213
      %s216 = sphi 0, %s215
      %s230 = sphi 0, %s216
      %s234 = sphi 0, %s234
      %s236 = sphi 0, %s234
      %s237 = sphi 0, %s236
      %s251 = sphi 0, %s237
      %s255 = sphi 0, %s255
      %s257 = sphi 0, %s255
      %s258 = sphi 0, %s257
      %s272 = sphi 0, %s258
      %s276 = sphi 0, %s276
      %s278 = sphi 0, %s276
      %s279 = sphi 0, %s278
      %s293 = sphi 0, %s279
      %s297 = sphi 0, %s297
      %s299 = sphi 0, %s297
      %s300 = sphi 0, %s299
      %s314 = sphi 0, %s300
      %s318 = sphi 0, %s318
      %s320 = sphi 0, %s318
      %s321 = sphi 0, %s320
      %s335 = sphi 0, %s321
      %s339 = sphi 0, %s339
      %s341 = sphi 0, %s339
      %s342 = sphi 0, %s341
      %s356 = sphi 0, %s342
      %s360 = sphi 0, %s360
      %s362 = sphi 0, %s360
      %s363 = sphi 0, %s362
      %s377 = sphi 0, %s363
      %s381 = sphi 0, %s381
      %s383 = sphi 0, %s381
      %s384 = sphi 0, %s383
      %s398 = sphi 0, %s384
      %s402 = sphi 0, %s402
      %s404 = sphi 0, %s402
      %s405 = sphi 0, %s404
      %s419 = sphi 0, %s405
      %s425 = sphi 0, %s427
      %s428 = sphi 0, %s425
      %s429 = sphi 0, %s428
      %s445 = sphi 0, %s429
    $region4: #{tpu_custom_call.1} parent=1 // loop_header_branch
      %30 = sbr.rel (%p28) target = $region8
    $region5: #{tpu_custom_call.1} parent=1 // loop_body
      %s32 = ssub.s32 %s27, 1
      %s33 = ssub.s32 %s27, 2
      %s34 = sadd.s32 %s27, 1
      %s35 = ssub.s32 %s27, %s34
      %p36 = scmp.eq.s32.totalorder %s35, 0
      %s38 = sadd.s32 %s37, 1
      %s39 = scalar_select %p36, %s37, %s38
      %p42 = pneg %p36
      %p43 = scmp.eq.s32.totalorder %s27, 1
      %p44 = por %p42, %p43
      %p45 = scmp.ne.s32.totalorder %s37, %s40
      %p46 = scmp.eq.s32.totalorder %s27, 0
      %p47 = por %p45, %p46
      %p48 = scmp.ne.s32.totalorder %s37, %s40
      %p49 = scmp.eq.s32.totalorder %s32, 1
      %p50 = por %p48, %p49
      %p51 = scmp.ne.s32.totalorder %s40, %s41
      %p52 = scmp.eq.s32.totalorder %s32, 0
      %p53 = por %p51, %p52
      %p54 = scmp.ne.s32.totalorder %s40, %s41
      %p55 = scmp.eq.s32.totalorder %s33, 1
      %p56 = por %p54, %p55
      %p58 = scmp.ne.s32.totalorder %s41, %s57
      %p59 = scmp.eq.s32.totalorder %s33, 0
      %p60 = por %p58, %p59
      %s61 = ssub.s32 %s27, %s34
      %p62 = scmp.eq.s32.totalorder %s61, 0
      %s64 = sadd.s32 %s63, 1
      %s65 = scalar_select %p62, %s63, %s64
      %p68 = pneg %p62
      %p69 = scmp.eq.s32.totalorder %s27, 1
      %p70 = por %p68, %p69
      %p71 = scmp.ne.s32.totalorder %s63, %s66
      %p72 = scmp.eq.s32.totalorder %s27, 0
      %p73 = por %p71, %p72
      %p74 = scmp.ne.s32.totalorder %s63, %s66
      %p75 = scmp.eq.s32.totalorder %s32, 1
      %p76 = por %p74, %p75
      %p77 = scmp.ne.s32.totalorder %s66, %s67
      %p78 = scmp.eq.s32.totalorder %s32, 0
      %p79 = por %p77, %p78
      %p80 = scmp.ne.s32.totalorder %s66, %s67
      %p81 = scmp.eq.s32.totalorder %s33, 1
      %p82 = por %p80, %p81
      %p84 = scmp.ne.s32.totalorder %s67, %s83
      %p85 = scmp.eq.s32.totalorder %s33, 0
      %p86 = por %p84, %p85
      %s88 = sadd.s32 %s87, 1
      %p91 = scmp.eq.s32.totalorder %s27, 1
      %p92 = scmp.ne.s32.totalorder %s87, %s89
      %p93 = scmp.eq.s32.totalorder %s27, 0
      %p94 = por %p92, %p93
      %p95 = scmp.ne.s32.totalorder %s87, %s89
      %p96 = scmp.eq.s32.totalorder %s32, 1
      %p97 = por %p95, %p96
      %p98 = scmp.ne.s32.totalorder %s89, %s90
      %p99 = scmp.eq.s32.totalorder %s32, 0
      %p100 = por %p98, %p99
      %p101 = scmp.ne.s32.totalorder %s89, %s90
      %p102 = scmp.eq.s32.totalorder %s33, 1
      %p103 = por %p101, %p102
      %p105 = scmp.ne.s32.totalorder %s90, %s104
      %p106 = scmp.eq.s32.totalorder %s33, 0
      %p107 = por %p105, %p106
      %s109 = sadd.s32 %s108, 1
      %p112 = scmp.eq.s32.totalorder %s27, 1
      %p113 = scmp.ne.s32.totalorder %s108, %s110
      %p114 = scmp.eq.s32.totalorder %s27, 0
      %p115 = por %p113, %p114
      %p116 = scmp.ne.s32.totalorder %s108, %s110
      %p117 = scmp.eq.s32.totalorder %s32, 1
      %p118 = por %p116, %p117
      %p119 = scmp.ne.s32.totalorder %s110, %s111
      %p120 = scmp.eq.s32.totalorder %s32, 0
      %p121 = por %p119, %p120
      %p122 = scmp.ne.s32.totalorder %s110, %s111
      %p123 = scmp.eq.s32.totalorder %s33, 1
      %p124 = por %p122, %p123
      %p126 = scmp.ne.s32.totalorder %s111, %s125
      %p127 = scmp.eq.s32.totalorder %s33, 0
      %p128 = por %p126, %p127
      %s130 = sadd.s32 %s129, 1
      %p133 = scmp.eq.s32.totalorder %s27, 1
      %p134 = scmp.ne.s32.totalorder %s129, %s131
      %p135 = scmp.eq.s32.totalorder %s27, 0
      %p136 = por %p134, %p135
      %p137 = scmp.ne.s32.totalorder %s129, %s131
      %p138 = scmp.eq.s32.totalorder %s32, 1
      %p139 = por %p137, %p138
      %p140 = scmp.ne.s32.totalorder %s131, %s132
      %p141 = scmp.eq.s32.totalorder %s32, 0
      %p142 = por %p140, %p141
      %p143 = scmp.ne.s32.totalorder %s131, %s132
      %p144 = scmp.eq.s32.totalorder %s33, 1
      %p145 = por %p143, %p144
      %p147 = scmp.ne.s32.totalorder %s132, %s146
      %p148 = scmp.eq.s32.totalorder %s33, 0
      %p149 = por %p147, %p148
      %s151 = sadd.s32 %s150, 1
      %p154 = scmp.eq.s32.totalorder %s27, 1
      %p155 = scmp.ne.s32.totalorder %s150, %s152
      %p156 = scmp.eq.s32.totalorder %s27, 0
      %p157 = por %p155, %p156
      %p158 = scmp.ne.s32.totalorder %s150, %s152
      %p159 = scmp.eq.s32.totalorder %s32, 1
      %p160 = por %p158, %p159
      %p161 = scmp.ne.s32.totalorder %s152, %s153
      %p162 = scmp.eq.s32.totalorder %s32, 0
      %p163 = por %p161, %p162
      %p164 = scmp.ne.s32.totalorder %s152, %s153
      %p165 = scmp.eq.s32.totalorder %s33, 1
      %p166 = por %p164, %p165
      %p168 = scmp.ne.s32.totalorder %s153, %s167
      %p169 = scmp.eq.s32.totalorder %s33, 0
      %p170 = por %p168, %p169
      %s172 = sadd.s32 %s171, 1
      %p175 = scmp.eq.s32.totalorder %s27, 1
      %p176 = scmp.ne.s32.totalorder %s171, %s173
      %p177 = scmp.eq.s32.totalorder %s27, 0
      %p178 = por %p176, %p177
      %p179 = scmp.ne.s32.totalorder %s171, %s173
      %p180 = scmp.eq.s32.totalorder %s32, 1
      %p181 = por %p179, %p180
      %p182 = scmp.ne.s32.totalorder %s173, %s174
      %p183 = scmp.eq.s32.totalorder %s32, 0
      %p184 = por %p182, %p183
      %p185 = scmp.ne.s32.totalorder %s173, %s174
      %p186 = scmp.eq.s32.totalorder %s33, 1
      %p187 = por %p185, %p186
      %p189 = scmp.ne.s32.totalorder %s174, %s188
      %p190 = scmp.eq.s32.totalorder %s33, 0
      %p191 = por %p189, %p190
      %s193 = sadd.s32 %s192, 1
      %p196 = scmp.eq.s32.totalorder %s27, 1
      %p197 = scmp.ne.s32.totalorder %s192, %s194
      %p198 = scmp.eq.s32.totalorder %s27, 0
      %p199 = por %p197, %p198
      %p200 = scmp.ne.s32.totalorder %s192, %s194
      %p201 = scmp.eq.s32.totalorder %s32, 1
      %p202 = por %p200, %p201
      %p203 = scmp.ne.s32.totalorder %s194, %s195
      %p204 = scmp.eq.s32.totalorder %s32, 0
      %p205 = por %p203, %p204
      %p206 = scmp.ne.s32.totalorder %s194, %s195
      %p207 = scmp.eq.s32.totalorder %s33, 1
      %p208 = por %p206, %p207
      %p210 = scmp.ne.s32.totalorder %s195, %s209
      %p211 = scmp.eq.s32.totalorder %s33, 0
      %p212 = por %p210, %p211
      %s214 = sadd.s32 %s213, 1
      %p217 = scmp.eq.s32.totalorder %s27, 1
      %p218 = scmp.ne.s32.totalorder %s213, %s215
      %p219 = scmp.eq.s32.totalorder %s27, 0
      %p220 = por %p218, %p219
      %p221 = scmp.ne.s32.totalorder %s213, %s215
      %p222 = scmp.eq.s32.totalorder %s32, 1
      %p223 = por %p221, %p222
      %p224 = scmp.ne.s32.totalorder %s215, %s216
      %p225 = scmp.eq.s32.totalorder %s32, 0
      %p226 = por %p224, %p225
      %p227 = scmp.ne.s32.totalorder %s215, %s216
      %p228 = scmp.eq.s32.totalorder %s33, 1
      %p229 = por %p227, %p228
      %p231 = scmp.ne.s32.totalorder %s216, %s230
      %p232 = scmp.eq.s32.totalorder %s33, 0
      %p233 = por %p231, %p232
      %s235 = sadd.s32 %s234, 1
      %p238 = scmp.eq.s32.totalorder %s27, 1
      %p239 = scmp.ne.s32.totalorder %s234, %s236
      %p240 = scmp.eq.s32.totalorder %s27, 0
      %p241 = por %p239, %p240
      %p242 = scmp.ne.s32.totalorder %s234, %s236
      %p243 = scmp.eq.s32.totalorder %s32, 1
      %p244 = por %p242, %p243
      %p245 = scmp.ne.s32.totalorder %s236, %s237
      %p246 = scmp.eq.s32.totalorder %s32, 0
      %p247 = por %p245, %p246
      %p248 = scmp.ne.s32.totalorder %s236, %s237
      %p249 = scmp.eq.s32.totalorder %s33, 1
      %p250 = por %p248, %p249
      %p252 = scmp.ne.s32.totalorder %s237, %s251
      %p253 = scmp.eq.s32.totalorder %s33, 0
      %p254 = por %p252, %p253
      %s256 = sadd.s32 %s255, 1
      %p259 = scmp.eq.s32.totalorder %s27, 1
      %p260 = scmp.ne.s32.totalorder %s255, %s257
      %p261 = scmp.eq.s32.totalorder %s27, 0
      %p262 = por %p260, %p261
      %p263 = scmp.ne.s32.totalorder %s255, %s257
      %p264 = scmp.eq.s32.totalorder %s32, 1
      %p265 = por %p263, %p264
      %p266 = scmp.ne.s32.totalorder %s257, %s258
      %p267 = scmp.eq.s32.totalorder %s32, 0
      %p268 = por %p266, %p267
      %p269 = scmp.ne.s32.totalorder %s257, %s258
      %p270 = scmp.eq.s32.totalorder %s33, 1
      %p271 = por %p269, %p270
      %p273 = scmp.ne.s32.totalorder %s258, %s272
      %p274 = scmp.eq.s32.totalorder %s33, 0
      %p275 = por %p273, %p274
      %s277 = sadd.s32 %s276, 1
      %p280 = scmp.eq.s32.totalorder %s27, 1
      %p281 = scmp.ne.s32.totalorder %s276, %s278
      %p282 = scmp.eq.s32.totalorder %s27, 0
      %p283 = por %p281, %p282
      %p284 = scmp.ne.s32.totalorder %s276, %s278
      %p285 = scmp.eq.s32.totalorder %s32, 1
      %p286 = por %p284, %p285
      %p287 = scmp.ne.s32.totalorder %s278, %s279
      %p288 = scmp.eq.s32.totalorder %s32, 0
      %p289 = por %p287, %p288
      %p290 = scmp.ne.s32.totalorder %s278, %s279
      %p291 = scmp.eq.s32.totalorder %s33, 1
      %p292 = por %p290, %p291
      %p294 = scmp.ne.s32.totalorder %s279, %s293
      %p295 = scmp.eq.s32.totalorder %s33, 0
      %p296 = por %p294, %p295
      %s298 = sadd.s32 %s297, 1
      %p301 = scmp.eq.s32.totalorder %s27, 1
      %p302 = scmp.ne.s32.totalorder %s297, %s299
      %p303 = scmp.eq.s32.totalorder %s27, 0
      %p304 = por %p302, %p303
      %p305 = scmp.ne.s32.totalorder %s297, %s299
      %p306 = scmp.eq.s32.totalorder %s32, 1
      %p307 = por %p305, %p306
      %p308 = scmp.ne.s32.totalorder %s299, %s300
      %p309 = scmp.eq.s32.totalorder %s32, 0
      %p310 = por %p308, %p309
      %p311 = scmp.ne.s32.totalorder %s299, %s300
      %p312 = scmp.eq.s32.totalorder %s33, 1
      %p313 = por %p311, %p312
      %p315 = scmp.ne.s32.totalorder %s300, %s314
      %p316 = scmp.eq.s32.totalorder %s33, 0
      %p317 = por %p315, %p316
      %s319 = sadd.s32 %s318, 1
      %p322 = scmp.eq.s32.totalorder %s27, 1
      %p323 = scmp.ne.s32.totalorder %s318, %s320
      %p324 = scmp.eq.s32.totalorder %s27, 0
      %p325 = por %p323, %p324
      %p326 = scmp.ne.s32.totalorder %s318, %s320
      %p327 = scmp.eq.s32.totalorder %s32, 1
      %p328 = por %p326, %p327
      %p329 = scmp.ne.s32.totalorder %s320, %s321
      %p330 = scmp.eq.s32.totalorder %s32, 0
      %p331 = por %p329, %p330
      %p332 = scmp.ne.s32.totalorder %s320, %s321
      %p333 = scmp.eq.s32.totalorder %s33, 1
      %p334 = por %p332, %p333
      %p336 = scmp.ne.s32.totalorder %s321, %s335
      %p337 = scmp.eq.s32.totalorder %s33, 0
      %p338 = por %p336, %p337
      %s340 = sadd.s32 %s339, 1
      %p343 = scmp.eq.s32.totalorder %s27, 1
      %p344 = scmp.ne.s32.totalorder %s339, %s341
      %p345 = scmp.eq.s32.totalorder %s27, 0
      %p346 = por %p344, %p345
      %p347 = scmp.ne.s32.totalorder %s339, %s341
      %p348 = scmp.eq.s32.totalorder %s32, 1
      %p349 = por %p347, %p348
      %p350 = scmp.ne.s32.totalorder %s341, %s342
      %p351 = scmp.eq.s32.totalorder %s32, 0
      %p352 = por %p350, %p351
      %p353 = scmp.ne.s32.totalorder %s341, %s342
      %p354 = scmp.eq.s32.totalorder %s33, 1
      %p355 = por %p353, %p354
      %p357 = scmp.ne.s32.totalorder %s342, %s356
      %p358 = scmp.eq.s32.totalorder %s33, 0
      %p359 = por %p357, %p358
      %s361 = sadd.s32 %s360, 1
      %p364 = scmp.eq.s32.totalorder %s27, 1
      %p365 = scmp.ne.s32.totalorder %s360, %s362
      %p366 = scmp.eq.s32.totalorder %s27, 0
      %p367 = por %p365, %p366
      %p368 = scmp.ne.s32.totalorder %s360, %s362
      %p369 = scmp.eq.s32.totalorder %s32, 1
      %p370 = por %p368, %p369
      %p371 = scmp.ne.s32.totalorder %s362, %s363
      %p372 = scmp.eq.s32.totalorder %s32, 0
      %p373 = por %p371, %p372
      %p374 = scmp.ne.s32.totalorder %s362, %s363
      %p375 = scmp.eq.s32.totalorder %s33, 1
      %p376 = por %p374, %p375
      %p378 = scmp.ne.s32.totalorder %s363, %s377
      %p379 = scmp.eq.s32.totalorder %s33, 0
      %p380 = por %p378, %p379
      %s382 = sadd.s32 %s381, 1
      %p385 = scmp.eq.s32.totalorder %s27, 1
      %p386 = scmp.ne.s32.totalorder %s381, %s383
      %p387 = scmp.eq.s32.totalorder %s27, 0
      %p388 = por %p386, %p387
      %p389 = scmp.ne.s32.totalorder %s381, %s383
      %p390 = scmp.eq.s32.totalorder %s32, 1
      %p391 = por %p389, %p390
      %p392 = scmp.ne.s32.totalorder %s383, %s384
      %p393 = scmp.eq.s32.totalorder %s32, 0
      %p394 = por %p392, %p393
      %p395 = scmp.ne.s32.totalorder %s383, %s384
      %p396 = scmp.eq.s32.totalorder %s33, 1
      %p397 = por %p395, %p396
      %p399 = scmp.ne.s32.totalorder %s384, %s398
      %p400 = scmp.eq.s32.totalorder %s33, 0
      %p401 = por %p399, %p400
      %s403 = sadd.s32 %s402, 1
      %p406 = scmp.eq.s32.totalorder %s27, 1
      %p407 = scmp.ne.s32.totalorder %s402, %s404
      %p408 = scmp.eq.s32.totalorder %s27, 0
      %p409 = por %p407, %p408
      %p410 = scmp.ne.s32.totalorder %s402, %s404
      %p411 = scmp.eq.s32.totalorder %s32, 1
      %p412 = por %p410, %p411
      %p413 = scmp.ne.s32.totalorder %s404, %s405
      %p414 = scmp.eq.s32.totalorder %s32, 0
      %p415 = por %p413, %p414
      %p416 = scmp.ne.s32.totalorder %s404, %s405
      %p417 = scmp.eq.s32.totalorder %s33, 1
      %p418 = por %p416, %p417
      %p420 = scmp.ne.s32.totalorder %s405, %s419
      %p421 = scmp.eq.s32.totalorder %s33, 0
      %p422 = por %p420, %p421
      %s423 = ssub.s32 %s27, %s34
      %p424 = scmp.eq.s32.totalorder %s423, 0
      %s426 = sadd.s32 %s425, 1
      %s427 = scalar_select %p424, %s425, %s426
      %p430 = pneg %p424
      %p431 = scmp.eq.s32.totalorder %s27, 1
      %p432 = por %p430, %p431
      %p433 = scmp.ne.s32.totalorder %s425, %s428
      %p434 = scmp.eq.s32.totalorder %s27, 0
      %p435 = por %p433, %p434
      %p436 = scmp.ne.s32.totalorder %s425, %s428
      %p437 = scmp.eq.s32.totalorder %s32, 1
      %p438 = por %p436, %p437
      %p439 = scmp.ne.s32.totalorder %s428, %s429
      %p440 = scmp.eq.s32.totalorder %s32, 0
      %p441 = por %p439, %p440
      %p442 = scmp.ne.s32.totalorder %s428, %s429
      %p443 = scmp.eq.s32.totalorder %s33, 1
      %p444 = por %p442, %p443
      %p446 = scmp.ne.s32.totalorder %s429, %s445
      %p447 = scmp.eq.s32.totalorder %s33, 0
      %p448 = por %p446, %p447
      %p449 = scmp.le.s32.totalorder 1, %s27
      %p450 = scmp.lt.s32.totalorder %s27, 3
      %p451 = pnand %p449, %p450
      %p452 = pneg %p451
      // Predicated region
      $region9: #{tpu_custom_call.1} parent=5 // pred_check
        _
      $region10: #{tpu_custom_call.1} parent=5 // pred_check_branch
        %454 = sbr.rel (%p451) target = $region12
      $region11: #{tpu_custom_call.1} parent=5 // pred_region
        %s455 = ssub.s32 %s27, 1
        // Predicated region
        $region13: #{tpu_custom_call.1} parent=11 // pred_check
          %p456 = pneg %p100
        $region14: #{tpu_custom_call.1} parent=11 // pred_check_branch
          %458 = sbr.rel (%p456) target = $region16
        $region15: #{tpu_custom_call.1} parent=11 // pred_region
          _
        $region16: #{tpu_custom_call.1} parent=11 // pred_fallthru
          _
        // Predicated region
        $region17: #{tpu_custom_call.1} parent=11 // pred_check
          %p459 = pneg %p121
        $region18: #{tpu_custom_call.1} parent=11 // pred_check_branch
          %461 = sbr.rel (%p459) target = $region20
        $region19: #{tpu_custom_call.1} parent=11 // pred_region
          _
        $region20: #{tpu_custom_call.1} parent=11 // pred_fallthru
          _
        // Predicated region
        $region21: #{tpu_custom_call.1} parent=11 // pred_check
          %p462 = pneg %p142
        $region22: #{tpu_custom_call.1} parent=11 // pred_check_branch
          %464 = sbr.rel (%p462) target = $region24
        $region23: #{tpu_custom_call.1} parent=11 // pred_region
          _
        $region24: #{tpu_custom_call.1} parent=11 // pred_fallthru
          _
        // Predicated region
        $region25: #{tpu_custom_call.1} parent=11 // pred_check
          %p465 = pneg %p163
        $region26: #{tpu_custom_call.1} parent=11 // pred_check_branch
          %467 = sbr.rel (%p465) target = $region28
        $region27: #{tpu_custom_call.1} parent=11 // pred_region
          _
        $region28: #{tpu_custom_call.1} parent=11 // pred_fallthru
          _
        // Predicated region
        $region29: #{tpu_custom_call.1} parent=11 // pred_check
          %p468 = pneg %p184
        $region30: #{tpu_custom_call.1} parent=11 // pred_check_branch
          %470 = sbr.rel (%p468) target = $region32
        $region31: #{tpu_custom_call.1} parent=11 // pred_region
          _
        $region32: #{tpu_custom_call.1} parent=11 // pred_fallthru
          _
        // Predicated region
        $region33: #{tpu_custom_call.1} parent=11 // pred_check
          %p471 = pneg %p205
        $region34: #{tpu_custom_call.1} parent=11 // pred_check_branch
          %473 = sbr.rel (%p471) target = $region36
        $region35: #{tpu_custom_call.1} parent=11 // pred_region
          _
        $region36: #{tpu_custom_call.1} parent=11 // pred_fallthru
          _
        // Predicated region
        $region37: #{tpu_custom_call.1} parent=11 // pred_check
          %p474 = pneg %p226
        $region38: #{tpu_custom_call.1} parent=11 // pred_check_branch
          %476 = sbr.rel (%p474) target = $region40
        $region39: #{tpu_custom_call.1} parent=11 // pred_region
          _
        $region40: #{tpu_custom_call.1} parent=11 // pred_fallthru
          _
        // Predicated region
        $region41: #{tpu_custom_call.1} parent=11 // pred_check
          %p477 = pneg %p247
        $region42: #{tpu_custom_call.1} parent=11 // pred_check_branch
          %479 = sbr.rel (%p477) target = $region44
        $region43: #{tpu_custom_call.1} parent=11 // pred_region
          _
        $region44: #{tpu_custom_call.1} parent=11 // pred_fallthru
          _
        // Predicated region
        $region45: #{tpu_custom_call.1} parent=11 // pred_check
          %p480 = pneg %p268
        $region46: #{tpu_custom_call.1} parent=11 // pred_check_branch
          %482 = sbr.rel (%p480) target = $region48
        $region47: #{tpu_custom_call.1} parent=11 // pred_region
          _
        $region48: #{tpu_custom_call.1} parent=11 // pred_fallthru
          _
        // Predicated region
        $region49: #{tpu_custom_call.1} parent=11 // pred_check
          %p483 = pneg %p289
        $region50: #{tpu_custom_call.1} parent=11 // pred_check_branch
          %485 = sbr.rel (%p483) target = $region52
        $region51: #{tpu_custom_call.1} parent=11 // pred_region
          _
        $region52: #{tpu_custom_call.1} parent=11 // pred_fallthru
          _
        // Predicated region
        $region53: #{tpu_custom_call.1} parent=11 // pred_check
          %p486 = pneg %p310
        $region54: #{tpu_custom_call.1} parent=11 // pred_check_branch
          %488 = sbr.rel (%p486) target = $region56
        $region55: #{tpu_custom_call.1} parent=11 // pred_region
          _
        $region56: #{tpu_custom_call.1} parent=11 // pred_fallthru
          _
        // Predicated region
        $region57: #{tpu_custom_call.1} parent=11 // pred_check
          %p489 = pneg %p331
        $region58: #{tpu_custom_call.1} parent=11 // pred_check_branch
          %491 = sbr.rel (%p489) target = $region60
        $region59: #{tpu_custom_call.1} parent=11 // pred_region
          _
        $region60: #{tpu_custom_call.1} parent=11 // pred_fallthru
          _
        // Predicated region
        $region61: #{tpu_custom_call.1} parent=11 // pred_check
          %p492 = pneg %p352
        $region62: #{tpu_custom_call.1} parent=11 // pred_check_branch
          %494 = sbr.rel (%p492) target = $region64
        $region63: #{tpu_custom_call.1} parent=11 // pred_region
          _
        $region64: #{tpu_custom_call.1} parent=11 // pred_fallthru
          _
        // Predicated region
        $region65: #{tpu_custom_call.1} parent=11 // pred_check
          %p495 = pneg %p373
        $region66: #{tpu_custom_call.1} parent=11 // pred_check_branch
          %497 = sbr.rel (%p495) target = $region68
        $region67: #{tpu_custom_call.1} parent=11 // pred_region
          _
        $region68: #{tpu_custom_call.1} parent=11 // pred_fallthru
          _
        // Predicated region
        $region69: #{tpu_custom_call.1} parent=11 // pred_check
          %p498 = pneg %p394
        $region70: #{tpu_custom_call.1} parent=11 // pred_check_branch
          %500 = sbr.rel (%p498) target = $region72
        $region71: #{tpu_custom_call.1} parent=11 // pred_region
          _
        $region72: #{tpu_custom_call.1} parent=11 // pred_fallthru
          _
        // Predicated region
        $region73: #{tpu_custom_call.1} parent=11 // pred_check
          %p501 = pneg %p415
        $region74: #{tpu_custom_call.1} parent=11 // pred_check_branch
          %503 = sbr.rel (%p501) target = $region76
        $region75: #{tpu_custom_call.1} parent=11 // pred_region
          _
        $region76: #{tpu_custom_call.1} parent=11 // pred_fallthru
          _
      $region12: #{tpu_custom_call.1} parent=5 // pred_fallthru
        _
      %p504 = scmp.lt.s32.totalorder %s27, 2
      // Predicated region
      $region77: #{tpu_custom_call.1} parent=5 // pred_check
        %p505 = pneg %p504
      $region78: #{tpu_custom_call.1} parent=5 // pred_check_branch
        %507 = sbr.rel (%p505) target = $region80
      $region79: #{tpu_custom_call.1} parent=5 // pred_region
        // Predicated region
        $region81: #{tpu_custom_call.1} parent=79 // pred_check
          %p508 = pneg %p47
        $region82: #{tpu_custom_call.1} parent=79 // pred_check_branch
          %510 = sbr.rel (%p508) target = $region84
        $region83: #{tpu_custom_call.1} parent=79 // pred_region
          %p511 = scmp.lt.s32.totalorder %s27, 1
          %s512 = scalar_select %p511, %s27, 1
          %s513 = smul.addr %s512, 8
          %s514 = scalar_lea.vmem %s0, %s513
        $region84: #{tpu_custom_call.1} parent=79 // pred_fallthru
          _
        // Predicated region
        $region85: #{tpu_custom_call.1} parent=79 // pred_check
          %p515 = pneg %p73
        $region86: #{tpu_custom_call.1} parent=79 // pred_check_branch
          %517 = sbr.rel (%p515) target = $region88
        $region87: #{tpu_custom_call.1} parent=79 // pred_region
          %p518 = scmp.lt.s32.totalorder %s27, 1
          %s519 = scalar_select %p518, %s27, 1
          %s520 = smul.addr %s519, 8
          %s521 = scalar_lea.vmem %s1, %s520
        $region88: #{tpu_custom_call.1} parent=79 // pred_fallthru
          _
      $region80: #{tpu_custom_call.1} parent=5 // pred_fallthru
        _
      %p522 = scmp.le.s32.totalorder 1, %s27
      %p523 = scmp.lt.s32.totalorder %s27, 3
      %p524 = pnand %p522, %p523
      %p525 = pneg %p524
      // Predicated region
      $region89: #{tpu_custom_call.1} parent=5 // pred_check
        _
      $region90: #{tpu_custom_call.1} parent=5 // pred_check_branch
        %527 = sbr.rel (%p524) target = $region92
      $region91: #{tpu_custom_call.1} parent=5 // pred_region
        %s528 = ssub.s32 %s27, 1
        %p529 = scmp.lt.s32.totalorder %s32, 1
        %s530 = scalar_select %p529, %s32, 1
        %s531 = smul.addr %s530, 8
        %s532 = scalar_lea.vmem %s0, %s531
        %p533 = pneg %p53
        %p534 = pneg %p50
        %p535 = scmp.lt.s32.totalorder %s32, 1
        %s536 = scalar_select %p535, %s32, 1
        %s537 = smul.addr %s536, 8
        %s538 = scalar_lea.vmem %s1, %s537
        %p539 = pneg %p79
        %p540 = pneg %p76
        %p541 = pneg %p100
        %p542 = pneg %p97
        %p543 = pneg %p121
        %p544 = pneg %p118
        %p545 = pneg %p142
        %p546 = pneg %p139
        %p547 = pneg %p163
        %p548 = pneg %p160
        %p549 = pneg %p184
        %p550 = pneg %p181
        %p551 = pneg %p205
        %p552 = pneg %p202
        %p553 = pneg %p226
        %p554 = pneg %p223
        %p555 = pneg %p247
        %p556 = pneg %p244
        %p557 = pneg %p268
        %p558 = pneg %p265
        %p559 = pneg %p289
        %p560 = pneg %p286
        %p561 = pneg %p310
        %p562 = pneg %p307
        %p563 = pneg %p331
        %p564 = pneg %p328
        %p565 = pneg %p352
        %p566 = pneg %p349
        %p567 = pneg %p373
        %p568 = pneg %p370
        %p569 = pneg %p394
        %p570 = pneg %p391
        %p571 = pneg %p415
        %p572 = pneg %p412
        %p573 = pneg %p441
        %p574 = pneg %p438
        %s575 = sand.u32 %s428, 1
        %s576 = scalar_lea.sflag [#allocation3], %s575
        %s577 = sand.u32 %s428, 1
        %s578 = smul.addr %s577, 8
        %s579 = scalar_lea.vmem [#allocation2], %s578
        %p580 = scmp.lt.s32.totalorder %s32, 1
        %s581 = scalar_select %p580, %s32, 1
        %s582 = smul.addr %s581, 8
        %s583 = scalar_lea.vmem %s0, %s582
        %p584 = scmp.lt.s32.totalorder %s32, 1
        %s585 = scalar_select %p584, %s32, 1
        %s586 = smul.addr %s585, 8
        %s587 = scalar_lea.vmem %s1, %s586
        %v589 = vld [vmem:[%s583] sm:$0xff]
        %v590 = vld [vmem:[%s587] sm:$0xff]
        %v591 = vld [vmem:[%s2] sm:$0xff]
        %v592 = vld [vmem:[%s2 + $0x8] sm:$0xff]
        %v593 = vld [vmem:[%s2 + $0x10] sm:$0xff]
        %v594 = vld [vmem:[%s2 + $0x18] sm:$0xff]
        %v595 = vld [vmem:[%s2 + $0x20] sm:$0xff]
        %v596 = vld [vmem:[%s2 + $0x28] sm:$0xff]
        %v597 = vld [vmem:[%s2 + $0x30] sm:$0xff]
        %v598 = vld [vmem:[%s2 + $0x38] sm:$0xff]
        %v599 = vld [vmem:[%s2 + $0x40] sm:$0xff]
        %v600 = vld [vmem:[%s2 + $0x48] sm:$0xff]
        %v601 = vld [vmem:[%s2 + $0x50] sm:$0xff]
        %v602 = vld [vmem:[%s2 + $0x58] sm:$0xff]
        %v603 = vld [vmem:[%s2 + $0x60] sm:$0xff]
        %v604 = vld [vmem:[%s2 + $0x68] sm:$0xff]
        %v605 = vld [vmem:[%s2 + $0x70] sm:$0xff]
        %v606 = vld [vmem:[%s2 + $0x78] sm:$0xff]
        %v607 = vld [vmem:[%s3] sm:$0xff]
        %v608 = vld [vmem:[%s3 + $0x8] sm:$0xff]
        %v609 = vld [vmem:[%s3 + $0x10] sm:$0xff]
        %v610 = vld [vmem:[%s3 + $0x18] sm:$0xff]
        %v611 = vld [vmem:[%s3 + $0x20] sm:$0xff]
        %v612 = vld [vmem:[%s3 + $0x28] sm:$0xff]
        %v613 = vld [vmem:[%s3 + $0x30] sm:$0xff]
        %v614 = vld [vmem:[%s3 + $0x38] sm:$0xff]
        %v615 = vld [vmem:[%s3 + $0x40] sm:$0xff]
        %v616 = vld [vmem:[%s3 + $0x48] sm:$0xff]
        %v617 = vld [vmem:[%s3 + $0x50] sm:$0xff]
        %v618 = vld [vmem:[%s3 + $0x58] sm:$0xff]
        %v619 = vld [vmem:[%s3 + $0x60] sm:$0xff]
        %v620 = vld [vmem:[%s3 + $0x68] sm:$0xff]
        %v621 = vld [vmem:[%s3 + $0x70] sm:$0xff]
        %v622 = vld [vmem:[%s3 + $0x78] sm:$0xff]
        %v623 = vld [vmem:[%s4] sm:$0xff]
        %v624 = vld [vmem:[%s4 + $0x8] sm:$0xff]
        %v625 = vld [vmem:[%s4 + $0x10] sm:$0xff]
        %v626 = vld [vmem:[%s4 + $0x18] sm:$0xff]
        %v627 = vld [vmem:[%s4 + $0x20] sm:$0xff]
        %v628 = vld [vmem:[%s4 + $0x28] sm:$0xff]
        %v629 = vld [vmem:[%s4 + $0x30] sm:$0xff]
        %v630 = vld [vmem:[%s4 + $0x38] sm:$0xff]
        %v631 = vld [vmem:[%s4 + $0x40] sm:$0xff]
        %v632 = vld [vmem:[%s4 + $0x48] sm:$0xff]
        %v633 = vld [vmem:[%s4 + $0x50] sm:$0xff]
        %v634 = vld [vmem:[%s4 + $0x58] sm:$0xff]
        %v635 = vld [vmem:[%s4 + $0x60] sm:$0xff]
        %v636 = vld [vmem:[%s4 + $0x68] sm:$0xff]
        %v637 = vld [vmem:[%s4 + $0x70] sm:$0xff]
        %v638 = vld [vmem:[%s4 + $0x78] sm:$0xff]
        %v639 = vld [vmem:[%s5] sm:$0xff]
        %v640 = vld [vmem:[%s5 + $0x8] sm:$0xff]
        %v641 = vld [vmem:[%s5 + $0x10] sm:$0xff]
        %v642 = vld [vmem:[%s5 + $0x18] sm:$0xff]
        %v643 = vld [vmem:[%s6] sm:$0x1]
        %v644 = vld [vmem:[%s6 + $0x1] sm:$0x1]
        %v645 = vld [vmem:[%s6 + $0x2] sm:$0x1]
        %v646 = vld [vmem:[%s6 + $0x3] sm:$0x1]
        %v647 = vld [vmem:[%s7] sm:$0x1]
        %v648 = vld [vmem:[%s7 + $0x1] sm:$0x1]
        %v649 = vld [vmem:[%s7 + $0x2] sm:$0x1]
        %v650 = vld [vmem:[%s7 + $0x3] sm:$0x1]
        %v651 = vld [vmem:[%s8] sm:$0x1]
        %v652 = vld [vmem:[%s8 + $0x1] sm:$0x1]
        %v653 = vld [vmem:[%s8 + $0x2] sm:$0x1]
        %v654 = vld [vmem:[%s8 + $0x3] sm:$0x1]
        %v655 = vld [vmem:[%s9] sm:$0x1]
        %v656 = vpack.c.bf16 %v589, %v589
        %v657 = vpack.c.bf16 %v592, %v591
        %v658 = vpack.c.bf16 %v594, %v593
        %v659 = vpack.c.bf16 %v596, %v595
        %v660 = vpack.c.bf16 %v598, %v597
        %v661 = vpack.c.bf16 %v600, %v599
        %v662 = vpack.c.bf16 %v602, %v601
        %v663 = vpack.c.bf16 %v604, %v603
        %v664 = vpack.c.bf16 %v606, %v605
        %v669 = vlaneseq
        %v670 = vshrl.u32 %v669, 7
        %v671 = vsub.s32 0, %v670
        %v672 = vrot.slane %v643, %v671
        %v673 = vlaneseq
        %v674 = vshrl.u32 %v673, 7
        %v675 = vsub.s32 0, %v674
        %v676 = vrot.slane %v644, %v675
        %v677 = vlaneseq
        %v678 = vshrl.u32 %v677, 7
        %v679 = vsub.s32 0, %v678
        %v680 = vrot.slane %v645, %v679
        %v681 = vlaneseq
        %v682 = vshrl.u32 %v681, 7
        %v683 = vsub.s32 0, %v682
        %v684 = vrot.slane %v646, %v683
        %vm689 = vcmask 261120
        %v691 = vsel %vm689, %v656, 0
        %693 = vmatprep.subr.bf16.mxu0 0
        %694 = vmatpush1.bf16.msra.mxu0 %v657
        %695 = vmatprep.subr.bf16.mxu0 0
        %696 = vmatpush1.bf16.msra.mxu0 %v658
        %697 = vmatprep.subr.bf16.mxu0 0
        %698 = vmatpush1.bf16.msra.mxu0 0
        %699 = vmatprep.subr.bf16.mxu0 0
        %700 = vmatpush1.bf16.msra.mxu0 0
        %701 = vmatprep.subr.bf16.mxu0 0
        %702 = vmatpush1.bf16.msra.mxu0 0
        %703 = vmatprep.subr.bf16.mxu0 0
        %704 = vmatpush1.bf16.msra.mxu0 0
        %705 = vmatprep.subr.bf16.mxu0 0
        %706 = vmatpush1.bf16.msra.mxu0 0
        %707 = vmatprep.subr.bf16.mxu0 0
        %708 = vmatpush1.bf16.msra.mxu0 0
        %709 = vmatprep.subr.bf16.mxu0 0
        %710 = vmatpush1.bf16.msra.mxu0 0
        %711 = vmatprep.subr.bf16.mxu0 0
        %712 = vmatpush1.bf16.msra.mxu0 0
        %713 = vmatprep.subr.bf16.mxu0 0
        %714 = vmatpush1.bf16.msra.mxu0 0
        %715 = vmatprep.subr.bf16.mxu0 0
        %716 = vmatpush1.bf16.msra.mxu0 0
        %717 = vmatprep.subr.bf16.mxu0 0
        %718 = vmatpush1.bf16.msra.mxu0 0
        %719 = vmatprep.subr.bf16.mxu0 0
        %720 = vmatpush1.bf16.msra.mxu0 0
        %721 = vmatprep.subr.bf16.mxu0 0
        %722 = vmatpush1.bf16.msra.mxu0 0
        %723 = vmatprep.subr.bf16.mxu0 0
        %724 = vmatpush1.bf16.msra.mxu0 0
        %725 = vmatprep.mubr.bf16.mxu0 0
        %726 = vmatmul.mubr.bf16.gmra.mrb[0].mxu0 %v691
        %v727 = vpop.f32.mrb[0].mxu0
        %v728 = vadd.f32 %v672, %v727
        %v729 = vpop.f32.mrb[0].mxu0
        %v730 = vpop.f32.mrb[0].mxu0
        %v731 = vpop.f32.mrb[0].mxu0
        %732 = vdwg.mxu0
        %733 = vmatprep.subr.bf16.mxu0 0
        %734 = vmatpush1.bf16.msra.mxu0 %v659
        %735 = vmatprep.subr.bf16.mxu0 0
        %736 = vmatpush1.bf16.msra.mxu0 %v660
        %737 = vmatprep.subr.bf16.mxu0 0
        %738 = vmatpush1.bf16.msra.mxu0 0
        %739 = vmatprep.subr.bf16.mxu0 0
        %740 = vmatpush1.bf16.msra.mxu0 0
        %741 = vmatprep.subr.bf16.mxu0 0
        %742 = vmatpush1.bf16.msra.mxu0 0
        %743 = vmatprep.subr.bf16.mxu0 0
        %744 = vmatpush1.bf16.msra.mxu0 0
        %745 = vmatprep.subr.bf16.mxu0 0
        %746 = vmatpush1.bf16.msra.mxu0 0
        %747 = vmatprep.subr.bf16.mxu0 0
        %748 = vmatpush1.bf16.msra.mxu0 0
        %749 = vmatprep.subr.bf16.mxu0 0
        %750 = vmatpush1.bf16.msra.mxu0 0
        %751 = vmatprep.subr.bf16.mxu0 0
        %752 = vmatpush1.bf16.msra.mxu0 0
        %753 = vmatprep.subr.bf16.mxu0 0
        %754 = vmatpush1.bf16.msra.mxu0 0
        %755 = vmatprep.subr.bf16.mxu0 0
        %756 = vmatpush1.bf16.msra.mxu0 0
        %757 = vmatprep.subr.bf16.mxu0 0
        %758 = vmatpush1.bf16.msra.mxu0 0
        %759 = vmatprep.subr.bf16.mxu0 0
        %760 = vmatpush1.bf16.msra.mxu0 0
        %761 = vmatprep.subr.bf16.mxu0 0
        %762 = vmatpush1.bf16.msra.mxu0 0
        %763 = vmatprep.subr.bf16.mxu0 0
        %764 = vmatpush1.bf16.msra.mxu0 0
        %765 = vmatprep.mubr.bf16.mxu0 0
        %766 = vmatmul.mubr.bf16.gmra.mrb[0].mxu0 %v691
        %v767 = vpop.f32.mrb[0].mxu0
        %v768 = vadd.f32 %v676, %v767
        %v769 = vpop.f32.mrb[0].mxu0
        %v770 = vpop.f32.mrb[0].mxu0
        %v771 = vpop.f32.mrb[0].mxu0
        %772 = vdwg.mxu0
        %773 = vmatprep.subr.bf16.mxu0 0
        %774 = vmatpush1.bf16.msra.mxu0 %v661
        %775 = vmatprep.subr.bf16.mxu0 0
        %776 = vmatpush1.bf16.msra.mxu0 %v662
        %777 = vmatprep.subr.bf16.mxu0 0
        %778 = vmatpush1.bf16.msra.mxu0 0
        %779 = vmatprep.subr.bf16.mxu0 0
        %780 = vmatpush1.bf16.msra.mxu0 0
        %781 = vmatprep.subr.bf16.mxu0 0
        %782 = vmatpush1.bf16.msra.mxu0 0
        %783 = vmatprep.subr.bf16.mxu0 0
        %784 = vmatpush1.bf16.msra.mxu0 0
        %785 = vmatprep.subr.bf16.mxu0 0
        %786 = vmatpush1.bf16.msra.mxu0 0
        %787 = vmatprep.subr.bf16.mxu0 0
        %788 = vmatpush1.bf16.msra.mxu0 0
        %789 = vmatprep.subr.bf16.mxu0 0
        %790 = vmatpush1.bf16.msra.mxu0 0
        %791 = vmatprep.subr.bf16.mxu0 0
        %792 = vmatpush1.bf16.msra.mxu0 0
        %793 = vmatprep.subr.bf16.mxu0 0
        %794 = vmatpush1.bf16.msra.mxu0 0
        %795 = vmatprep.subr.bf16.mxu0 0
        %796 = vmatpush1.bf16.msra.mxu0 0
        %797 = vmatprep.subr.bf16.mxu0 0
        %798 = vmatpush1.bf16.msra.mxu0 0
        %799 = vmatprep.subr.bf16.mxu0 0
        %800 = vmatpush1.bf16.msra.mxu0 0
        %801 = vmatprep.subr.bf16.mxu0 0
        %802 = vmatpush1.bf16.msra.mxu0 0
        %803 = vmatprep.subr.bf16.mxu0 0
        %804 = vmatpush1.bf16.msra.mxu0 0
        %805 = vmatprep.mubr.bf16.mxu0 0
        %806 = vmatmul.mubr.bf16.gmra.mrb[0].mxu0 %v691
        %v807 = vpop.f32.mrb[0].mxu0
        %v808 = vadd.f32 %v680, %v807
        %v809 = vpop.f32.mrb[0].mxu0
        %v810 = vpop.f32.mrb[0].mxu0
        %v811 = vpop.f32.mrb[0].mxu0
        %812 = vdwg.mxu0
        %813 = vmatprep.subr.bf16.mxu0 0
        %814 = vmatpush1.bf16.msra.mxu0 %v663
        %815 = vmatprep.subr.bf16.mxu0 0
        %816 = vmatpush1.bf16.msra.mxu0 %v664
        %817 = vmatprep.subr.bf16.mxu0 0
        %818 = vmatpush1.bf16.msra.mxu0 0
        %819 = vmatprep.subr.bf16.mxu0 0
        %820 = vmatpush1.bf16.msra.mxu0 0
        %821 = vmatprep.subr.bf16.mxu0 0
        %822 = vmatpush1.bf16.msra.mxu0 0
        %823 = vmatprep.subr.bf16.mxu0 0
        %824 = vmatpush1.bf16.msra.mxu0 0
        %825 = vmatprep.subr.bf16.mxu0 0
        %826 = vmatpush1.bf16.msra.mxu0 0
        %827 = vmatprep.subr.bf16.mxu0 0
        %828 = vmatpush1.bf16.msra.mxu0 0
        %829 = vmatprep.subr.bf16.mxu0 0
        %830 = vmatpush1.bf16.msra.mxu0 0
        %831 = vmatprep.subr.bf16.mxu0 0
        %832 = vmatpush1.bf16.msra.mxu0 0
        %833 = vmatprep.subr.bf16.mxu0 0
        %834 = vmatpush1.bf16.msra.mxu0 0
        %835 = vmatprep.subr.bf16.mxu0 0
        %836 = vmatpush1.bf16.msra.mxu0 0
        %837 = vmatprep.subr.bf16.mxu0 0
        %838 = vmatpush1.bf16.msra.mxu0 0
        %839 = vmatprep.subr.bf16.mxu0 0
        %840 = vmatpush1.bf16.msra.mxu0 0
        %841 = vmatprep.subr.bf16.mxu0 0
        %842 = vmatpush1.bf16.msra.mxu0 0
        %843 = vmatprep.subr.bf16.mxu0 0
        %844 = vmatpush1.bf16.msra.mxu0 0
        %845 = vmatprep.mubr.bf16.mxu0 0
        %846 = vmatmul.mubr.bf16.gmra.mrb[0].mxu0 %v691
        %v847 = vpop.f32.mrb[0].mxu0
        %v848 = vadd.f32 %v684, %v847
        %v849 = vpop.f32.mrb[0].mxu0
        %v850 = vpop.f32.mrb[0].mxu0
        %v851 = vpop.f32.mrb[0].mxu0
        %852 = vdwg.mxu0
        %v853 = vpack.c.bf16 %v608, %v607
        %v854 = vpack.c.bf16 %v610, %v609
        %v855 = vpack.c.bf16 %v612, %v611
        %v856 = vpack.c.bf16 %v614, %v613
        %v857 = vpack.c.bf16 %v616, %v615
        %v858 = vpack.c.bf16 %v618, %v617
        %v859 = vpack.c.bf16 %v620, %v619
        %v860 = vpack.c.bf16 %v622, %v621
        %v865 = vlaneseq
        %v866 = vshrl.u32 %v865, 7
        %v867 = vsub.s32 0, %v866
        %v868 = vrot.slane %v647, %v867
        %v869 = vlaneseq
        %v870 = vshrl.u32 %v869, 7
        %v871 = vsub.s32 0, %v870
        %v872 = vrot.slane %v648, %v871
        %v873 = vlaneseq
        %v874 = vshrl.u32 %v873, 7
        %v875 = vsub.s32 0, %v874
        %v876 = vrot.slane %v649, %v875
        %v877 = vlaneseq
        %v878 = vshrl.u32 %v877, 7
        %v879 = vsub.s32 0, %v878
        %v880 = vrot.slane %v650, %v879
        %885 = vmatprep.subr.bf16.mxu0 0
        %886 = vmatpush1.bf16.msra.mxu0 %v853
        %887 = vmatprep.subr.bf16.mxu0 0
        %888 = vmatpush1.bf16.msra.mxu0 %v854
        %889 = vmatprep.subr.bf16.mxu0 0
        %890 = vmatpush1.bf16.msra.mxu0 0
        %891 = vmatprep.subr.bf16.mxu0 0
        %892 = vmatpush1.bf16.msra.mxu0 0
        %893 = vmatprep.subr.bf16.mxu0 0
        %894 = vmatpush1.bf16.msra.mxu0 0
        %895 = vmatprep.subr.bf16.mxu0 0
        %896 = vmatpush1.bf16.msra.mxu0 0
        %897 = vmatprep.subr.bf16.mxu0 0
        %898 = vmatpush1.bf16.msra.mxu0 0
        %899 = vmatprep.subr.bf16.mxu0 0
        %900 = vmatpush1.bf16.msra.mxu0 0
        %901 = vmatprep.subr.bf16.mxu0 0
        %902 = vmatpush1.bf16.msra.mxu0 0
        %903 = vmatprep.subr.bf16.mxu0 0
        %904 = vmatpush1.bf16.msra.mxu0 0
        %905 = vmatprep.subr.bf16.mxu0 0
        %906 = vmatpush1.bf16.msra.mxu0 0
        %907 = vmatprep.subr.bf16.mxu0 0
        %908 = vmatpush1.bf16.msra.mxu0 0
        %909 = vmatprep.subr.bf16.mxu0 0
        %910 = vmatpush1.bf16.msra.mxu0 0
        %911 = vmatprep.subr.bf16.mxu0 0
        %912 = vmatpush1.bf16.msra.mxu0 0
        %913 = vmatprep.subr.bf16.mxu0 0
        %914 = vmatpush1.bf16.msra.mxu0 0
        %915 = vmatprep.subr.bf16.mxu0 0
        %916 = vmatpush1.bf16.msra.mxu0 0
        %917 = vmatprep.mubr.bf16.mxu0 0
        %918 = vmatmul.mubr.bf16.gmra.mrb[0].mxu0 %v691
        %v919 = vpop.f32.mrb[0].mxu0
        %v920 = vadd.f32 %v868, %v919
        %v921 = vpop.f32.mrb[0].mxu0
        %v922 = vpop.f32.mrb[0].mxu0
        %v923 = vpop.f32.mrb[0].mxu0
        %924 = vdwg.mxu0
        %925 = vmatprep.subr.bf16.mxu0 0
        %926 = vmatpush1.bf16.msra.mxu0 %v855
        %927 = vmatprep.subr.bf16.mxu0 0
        %928 = vmatpush1.bf16.msra.mxu0 %v856
        %929 = vmatprep.subr.bf16.mxu0 0
        %930 = vmatpush1.bf16.msra.mxu0 0
        %931 = vmatprep.subr.bf16.mxu0 0
        %932 = vmatpush1.bf16.msra.mxu0 0
        %933 = vmatprep.subr.bf16.mxu0 0
        %934 = vmatpush1.bf16.msra.mxu0 0
        %935 = vmatprep.subr.bf16.mxu0 0
        %936 = vmatpush1.bf16.msra.mxu0 0
        %937 = vmatprep.subr.bf16.mxu0 0
        %938 = vmatpush1.bf16.msra.mxu0 0
        %939 = vmatprep.subr.bf16.mxu0 0
        %940 = vmatpush1.bf16.msra.mxu0 0
        %941 = vmatprep.subr.bf16.mxu0 0
        %942 = vmatpush1.bf16.msra.mxu0 0
        %943 = vmatprep.subr.bf16.mxu0 0
        %944 = vmatpush1.bf16.msra.mxu0 0
        %945 = vmatprep.subr.bf16.mxu0 0
        %946 = vmatpush1.bf16.msra.mxu0 0
        %947 = vmatprep.subr.bf16.mxu0 0
        %948 = vmatpush1.bf16.msra.mxu0 0
        %949 = vmatprep.subr.bf16.mxu0 0
        %950 = vmatpush1.bf16.msra.mxu0 0
        %951 = vmatprep.subr.bf16.mxu0 0
        %952 = vmatpush1.bf16.msra.mxu0 0
        %953 = vmatprep.subr.bf16.mxu0 0
        %954 = vmatpush1.bf16.msra.mxu0 0
        %955 = vmatprep.subr.bf16.mxu0 0
        %956 = vmatpush1.bf16.msra.mxu0 0
        %957 = vmatprep.mubr.bf16.mxu0 0
        %958 = vmatmul.mubr.bf16.gmra.mrb[0].mxu0 %v691
        %v959 = vpop.f32.mrb[0].mxu0
        %v960 = vadd.f32 %v872, %v959
        %v961 = vpop.f32.mrb[0].mxu0
        %v962 = vpop.f32.mrb[0].mxu0
        %v963 = vpop.f32.mrb[0].mxu0
        %964 = vdwg.mxu0
        %965 = vmatprep.subr.bf16.mxu0 0
        %966 = vmatpush1.bf16.msra.mxu0 %v857
        %967 = vmatprep.subr.bf16.mxu0 0
        %968 = vmatpush1.bf16.msra.mxu0 %v858
        %969 = vmatprep.subr.bf16.mxu0 0
        %970 = vmatpush1.bf16.msra.mxu0 0
        %971 = vmatprep.subr.bf16.mxu0 0
        %972 = vmatpush1.bf16.msra.mxu0 0
        %973 = vmatprep.subr.bf16.mxu0 0
        %974 = vmatpush1.bf16.msra.mxu0 0
        %975 = vmatprep.subr.bf16.mxu0 0
        %976 = vmatpush1.bf16.msra.mxu0 0
        %977 = vmatprep.subr.bf16.mxu0 0
        %978 = vmatpush1.bf16.msra.mxu0 0
        %979 = vmatprep.subr.bf16.mxu0 0
        %980 = vmatpush1.bf16.msra.mxu0 0
        %981 = vmatprep.subr.bf16.mxu0 0
        %982 = vmatpush1.bf16.msra.mxu0 0
        %983 = vmatprep.subr.bf16.mxu0 0
        %984 = vmatpush1.bf16.msra.mxu0 0
        %985 = vmatprep.subr.bf16.mxu0 0
        %986 = vmatpush1.bf16.msra.mxu0 0
        %987 = vmatprep.subr.bf16.mxu0 0
        %988 = vmatpush1.bf16.msra.mxu0 0
        %989 = vmatprep.subr.bf16.mxu0 0
        %990 = vmatpush1.bf16.msra.mxu0 0
        %991 = vmatprep.subr.bf16.mxu0 0
        %992 = vmatpush1.bf16.msra.mxu0 0
        %993 = vmatprep.subr.bf16.mxu0 0
        %994 = vmatpush1.bf16.msra.mxu0 0
        %995 = vmatprep.subr.bf16.mxu0 0
        %996 = vmatpush1.bf16.msra.mxu0 0
        %997 = vmatprep.mubr.bf16.mxu0 0
        %998 = vmatmul.mubr.bf16.gmra.mrb[0].mxu0 %v691
        %v999 = vpop.f32.mrb[0].mxu0
        %v1000 = vadd.f32 %v876, %v999
        %v1001 = vpop.f32.mrb[0].mxu0
        %v1002 = vpop.f32.mrb[0].mxu0
        %v1003 = vpop.f32.mrb[0].mxu0
        %1004 = vdwg.mxu0
        %1005 = vmatprep.subr.bf16.mxu0 0
        %1006 = vmatpush1.bf16.msra.mxu0 %v859
        %1007 = vmatprep.subr.bf16.mxu0 0
        %1008 = vmatpush1.bf16.msra.mxu0 %v860
        %1009 = vmatprep.subr.bf16.mxu0 0
        %1010 = vmatpush1.bf16.msra.mxu0 0
        %1011 = vmatprep.subr.bf16.mxu0 0
        %1012 = vmatpush1.bf16.msra.mxu0 0
        %1013 = vmatprep.subr.bf16.mxu0 0
        %1014 = vmatpush1.bf16.msra.mxu0 0
        %1015 = vmatprep.subr.bf16.mxu0 0
        %1016 = vmatpush1.bf16.msra.mxu0 0
        %1017 = vmatprep.subr.bf16.mxu0 0
        %1018 = vmatpush1.bf16.msra.mxu0 0
        %1019 = vmatprep.subr.bf16.mxu0 0
        %1020 = vmatpush1.bf16.msra.mxu0 0
        %1021 = vmatprep.subr.bf16.mxu0 0
        %1022 = vmatpush1.bf16.msra.mxu0 0
        %1023 = vmatprep.subr.bf16.mxu0 0
        %1024 = vmatpush1.bf16.msra.mxu0 0
        %1025 = vmatprep.subr.bf16.mxu0 0
        %1026 = vmatpush1.bf16.msra.mxu0 0
        %1027 = vmatprep.subr.bf16.mxu0 0
        %1028 = vmatpush1.bf16.msra.mxu0 0
        %1029 = vmatprep.subr.bf16.mxu0 0
        %1030 = vmatpush1.bf16.msra.mxu0 0
        %1031 = vmatprep.subr.bf16.mxu0 0
        %1032 = vmatpush1.bf16.msra.mxu0 0
        %1033 = vmatprep.subr.bf16.mxu0 0
        %1034 = vmatpush1.bf16.msra.mxu0 0
        %1035 = vmatprep.subr.bf16.mxu0 0
        %1036 = vmatpush1.bf16.msra.mxu0 0
        %1037 = vmatprep.mubr.bf16.mxu0 0
        %1038 = vmatmul.mubr.bf16.gmra.mrb[0].mxu0 %v691
        %v1039 = vpop.f32.mrb[0].mxu0
        %v1040 = vadd.f32 %v880, %v1039
        %v1041 = vpop.f32.mrb[0].mxu0
        %v1042 = vpop.f32.mrb[0].mxu0
        %v1043 = vpop.f32.mrb[0].mxu0
        %1044 = vdwg.mxu0
        %v1045 = vpack.c.bf16 %v624, %v623
        %v1046 = vpack.c.bf16 %v626, %v625
        %v1047 = vpack.c.bf16 %v628, %v627
        %v1048 = vpack.c.bf16 %v630, %v629
        %v1049 = vpack.c.bf16 %v632, %v631
        %v1050 = vpack.c.bf16 %v634, %v633
        %v1051 = vpack.c.bf16 %v636, %v635
        %v1052 = vpack.c.bf16 %v638, %v637
        %v1057 = vlaneseq
        %v1058 = vshrl.u32 %v1057, 7
        %v1059 = vsub.s32 0, %v1058
        %v1060 = vrot.slane %v651, %v1059
        %v1061 = vlaneseq
        %v1062 = vshrl.u32 %v1061, 7
        %v1063 = vsub.s32 0, %v1062
        %v1064 = vrot.slane %v652, %v1063
        %v1065 = vlaneseq
        %v1066 = vshrl.u32 %v1065, 7
        %v1067 = vsub.s32 0, %v1066
        %v1068 = vrot.slane %v653, %v1067
        %v1069 = vlaneseq
        %v1070 = vshrl.u32 %v1069, 7
        %v1071 = vsub.s32 0, %v1070
        %v1072 = vrot.slane %v654, %v1071
        %1077 = vmatprep.subr.bf16.mxu0 0
        %1078 = vmatpush1.bf16.msra.mxu0 %v1045
        %1079 = vmatprep.subr.bf16.mxu0 0
        %1080 = vmatpush1.bf16.msra.mxu0 %v1046
        %1081 = vmatprep.subr.bf16.mxu0 0
        %1082 = vmatpush1.bf16.msra.mxu0 0
        %1083 = vmatprep.subr.bf16.mxu0 0
        %1084 = vmatpush1.bf16.msra.mxu0 0
        %1085 = vmatprep.subr.bf16.mxu0 0
        %1086 = vmatpush1.bf16.msra.mxu0 0
        %1087 = vmatprep.subr.bf16.mxu0 0
        %1088 = vmatpush1.bf16.msra.mxu0 0
        %1089 = vmatprep.subr.bf16.mxu0 0
        %1090 = vmatpush1.bf16.msra.mxu0 0
        %1091 = vmatprep.subr.bf16.mxu0 0
        %1092 = vmatpush1.bf16.msra.mxu0 0
        %1093 = vmatprep.subr.bf16.mxu0 0
        %1094 = vmatpush1.bf16.msra.mxu0 0
        %1095 = vmatprep.subr.bf16.mxu0 0
        %1096 = vmatpush1.bf16.msra.mxu0 0
        %1097 = vmatprep.subr.bf16.mxu0 0
        %1098 = vmatpush1.bf16.msra.mxu0 0
        %1099 = vmatprep.subr.bf16.mxu0 0
        %1100 = vmatpush1.bf16.msra.mxu0 0
        %1101 = vmatprep.subr.bf16.mxu0 0
        %1102 = vmatpush1.bf16.msra.mxu0 0
        %1103 = vmatprep.subr.bf16.mxu0 0
        %1104 = vmatpush1.bf16.msra.mxu0 0
        %1105 = vmatprep.subr.bf16.mxu0 0
        %1106 = vmatpush1.bf16.msra.mxu0 0
        %1107 = vmatprep.subr.bf16.mxu0 0
        %1108 = vmatpush1.bf16.msra.mxu0 0
        %1109 = vmatprep.mubr.bf16.mxu0 0
        %1110 = vmatmul.mubr.bf16.gmra.mrb[0].mxu0 %v691
        %v1111 = vpop.f32.mrb[0].mxu0
        %v1112 = vadd.f32 %v1060, %v1111
        %v1113 = vpop.f32.mrb[0].mxu0
        %v1114 = vpop.f32.mrb[0].mxu0
        %v1115 = vpop.f32.mrb[0].mxu0
        %1116 = vdwg.mxu0
        %1117 = vmatprep.subr.bf16.mxu0 0
        %1118 = vmatpush1.bf16.msra.mxu0 %v1047
        %1119 = vmatprep.subr.bf16.mxu0 0
        %1120 = vmatpush1.bf16.msra.mxu0 %v1048
        %1121 = vmatprep.subr.bf16.mxu0 0
        %1122 = vmatpush1.bf16.msra.mxu0 0
        %1123 = vmatprep.subr.bf16.mxu0 0
        %1124 = vmatpush1.bf16.msra.mxu0 0
        %1125 = vmatprep.subr.bf16.mxu0 0
        %1126 = vmatpush1.bf16.msra.mxu0 0
        %1127 = vmatprep.subr.bf16.mxu0 0
        %1128 = vmatpush1.bf16.msra.mxu0 0
        %1129 = vmatprep.subr.bf16.mxu0 0
        %1130 = vmatpush1.bf16.msra.mxu0 0
        %1131 = vmatprep.subr.bf16.mxu0 0
        %1132 = vmatpush1.bf16.msra.mxu0 0
        %1133 = vmatprep.subr.bf16.mxu0 0
        %1134 = vmatpush1.bf16.msra.mxu0 0
        %1135 = vmatprep.subr.bf16.mxu0 0
        %1136 = vmatpush1.bf16.msra.mxu0 0
        %1137 = vmatprep.subr.bf16.mxu0 0
        %1138 = vmatpush1.bf16.msra.mxu0 0
        %1139 = vmatprep.subr.bf16.mxu0 0
        %1140 = vmatpush1.bf16.msra.mxu0 0
        %1141 = vmatprep.subr.bf16.mxu0 0
        %1142 = vmatpush1.bf16.msra.mxu0 0
        %1143 = vmatprep.subr.bf16.mxu0 0
        %1144 = vmatpush1.bf16.msra.mxu0 0
        %1145 = vmatprep.subr.bf16.mxu0 0
        %1146 = vmatpush1.bf16.msra.mxu0 0
        %1147 = vmatprep.subr.bf16.mxu0 0
        %1148 = vmatpush1.bf16.msra.mxu0 0
        %1149 = vmatprep.mubr.bf16.mxu0 0
        %1150 = vmatmul.mubr.bf16.gmra.mrb[0].mxu0 %v691
        %v1151 = vpop.f32.mrb[0].mxu0
        %v1152 = vadd.f32 %v1064, %v1151
        %v1153 = vpop.f32.mrb[0].mxu0
        %v1154 = vpop.f32.mrb[0].mxu0
        %v1155 = vpop.f32.mrb[0].mxu0
        %1156 = vdwg.mxu0
        %1157 = vmatprep.subr.bf16.mxu0 0
        %1158 = vmatpush1.bf16.msra.mxu0 %v1049
        %1159 = vmatprep.subr.bf16.mxu0 0
        %1160 = vmatpush1.bf16.msra.mxu0 %v1050
        %1161 = vmatprep.subr.bf16.mxu0 0
        %1162 = vmatpush1.bf16.msra.mxu0 0
        %1163 = vmatprep.subr.bf16.mxu0 0
        %1164 = vmatpush1.bf16.msra.mxu0 0
        %1165 = vmatprep.subr.bf16.mxu0 0
        %1166 = vmatpush1.bf16.msra.mxu0 0
        %1167 = vmatprep.subr.bf16.mxu0 0
        %1168 = vmatpush1.bf16.msra.mxu0 0
        %1169 = vmatprep.subr.bf16.mxu0 0
        %1170 = vmatpush1.bf16.msra.mxu0 0
        %1171 = vmatprep.subr.bf16.mxu0 0
        %1172 = vmatpush1.bf16.msra.mxu0 0
        %1173 = vmatprep.subr.bf16.mxu0 0
        %1174 = vmatpush1.bf16.msra.mxu0 0
        %1175 = vmatprep.subr.bf16.mxu0 0
        %1176 = vmatpush1.bf16.msra.mxu0 0
        %1177 = vmatprep.subr.bf16.mxu0 0
        %1178 = vmatpush1.bf16.msra.mxu0 0
        %1179 = vmatprep.subr.bf16.mxu0 0
        %1180 = vmatpush1.bf16.msra.mxu0 0
        %1181 = vmatprep.subr.bf16.mxu0 0
        %1182 = vmatpush1.bf16.msra.mxu0 0
        %1183 = vmatprep.subr.bf16.mxu0 0
        %1184 = vmatpush1.bf16.msra.mxu0 0
        %1185 = vmatprep.subr.bf16.mxu0 0
        %1186 = vmatpush1.bf16.msra.mxu0 0
        %1187 = vmatprep.subr.bf16.mxu0 0
        %1188 = vmatpush1.bf16.msra.mxu0 0
        %1189 = vmatprep.mubr.bf16.mxu0 0
        %1190 = vmatmul.mubr.bf16.gmra.mrb[0].mxu0 %v691
        %v1191 = vpop.f32.mrb[0].mxu0
        %v1192 = vadd.f32 %v1068, %v1191
        %v1193 = vpop.f32.mrb[0].mxu0
        %v1194 = vpop.f32.mrb[0].mxu0
        %v1195 = vpop.f32.mrb[0].mxu0
        %1196 = vdwg.mxu0
        %1197 = vmatprep.subr.bf16.mxu0 0
        %1198 = vmatpush1.bf16.msra.mxu0 %v1051
        %1199 = vmatprep.subr.bf16.mxu0 0
        %1200 = vmatpush1.bf16.msra.mxu0 %v1052
        %1201 = vmatprep.subr.bf16.mxu0 0
        %1202 = vmatpush1.bf16.msra.mxu0 0
        %1203 = vmatprep.subr.bf16.mxu0 0
        %1204 = vmatpush1.bf16.msra.mxu0 0
        %1205 = vmatprep.subr.bf16.mxu0 0
        %1206 = vmatpush1.bf16.msra.mxu0 0
        %1207 = vmatprep.subr.bf16.mxu0 0
        %1208 = vmatpush1.bf16.msra.mxu0 0
        %1209 = vmatprep.subr.bf16.mxu0 0
        %1210 = vmatpush1.bf16.msra.mxu0 0
        %1211 = vmatprep.subr.bf16.mxu0 0
        %1212 = vmatpush1.bf16.msra.mxu0 0
        %1213 = vmatprep.subr.bf16.mxu0 0
        %1214 = vmatpush1.bf16.msra.mxu0 0
        %1215 = vmatprep.subr.bf16.mxu0 0
        %1216 = vmatpush1.bf16.msra.mxu0 0
        %1217 = vmatprep.subr.bf16.mxu0 0
        %1218 = vmatpush1.bf16.msra.mxu0 0
        %1219 = vmatprep.subr.bf16.mxu0 0
        %1220 = vmatpush1.bf16.msra.mxu0 0
        %1221 = vmatprep.subr.bf16.mxu0 0
        %1222 = vmatpush1.bf16.msra.mxu0 0
        %1223 = vmatprep.subr.bf16.mxu0 0
        %1224 = vmatpush1.bf16.msra.mxu0 0
        %1225 = vmatprep.subr.bf16.mxu0 0
        %1226 = vmatpush1.bf16.msra.mxu0 0
        %1227 = vmatprep.subr.bf16.mxu0 0
        %1228 = vmatpush1.bf16.msra.mxu0 0
        %1229 = vmatprep.mubr.bf16.mxu0 0
        %1230 = vmatmul.mubr.bf16.gmra.mrb[0].mxu0 %v691
        %v1231 = vpop.f32.mrb[0].mxu0
        %v1232 = vadd.f32 %v1072, %v1231
        %v1233 = vpop.f32.mrb[0].mxu0
        %v1234 = vpop.f32.mrb[0].mxu0
        %v1235 = vpop.f32.mrb[0].mxu0
        %1236 = vdwg.mxu0
        %v1237 = vpack.c.bf16 %v728, %v728
        %v1238 = vpack.c.bf16 %v768, %v768
        %v1239 = vpack.c.bf16 %v808, %v808
        %v1240 = vpack.c.bf16 %v848, %v848
        %v1241 = vpack.c.bf16 %v920, %v920
        %v1242 = vpack.c.bf16 %v960, %v960
        %v1243 = vpack.c.bf16 %v1000, %v1000
        %v1244 = vpack.c.bf16 %v1040, %v1040
        %vm1245 = vcmask 64512
        %v1247 = vsel %vm1245, %v1237, 0
        %v1250 = vsel %vm1245, %v1241, 0
        %1252 = vmatprep.subr.bf16.mxu0 0
        %1253 = vmatpush1.bf16.xpose.msra.mxu0 %v1250
        %1254 = vmatprep.subr.bf16.mxu0 0
        %1255 = vmatpush1.bf16.xpose.msra.mxu0 0
        %1256 = vmatprep.subr.bf16.mxu0 0
        %1257 = vmatpush1.bf16.xpose.msra.mxu0 0
        %1258 = vmatprep.subr.bf16.mxu0 0
        %1259 = vmatpush1.bf16.xpose.msra.mxu0 0
        %1260 = vmatprep.subr.bf16.mxu0 0
        %1261 = vmatpush1.bf16.xpose.msra.mxu0 0
        %1262 = vmatprep.subr.bf16.mxu0 0
        %1263 = vmatpush1.bf16.xpose.msra.mxu0 0
        %1264 = vmatprep.subr.bf16.mxu0 0
        %1265 = vmatpush1.bf16.xpose.msra.mxu0 0
        %1266 = vmatprep.subr.bf16.mxu0 0
        %1267 = vmatpush1.bf16.xpose.msra.mxu0 0
        %1268 = vmatprep.subr.bf16.mxu0 0
        %1269 = vmatpush1.bf16.xpose.msra.mxu0 0
        %1270 = vmatprep.subr.bf16.mxu0 0
        %1271 = vmatpush1.bf16.xpose.msra.mxu0 0
        %1272 = vmatprep.subr.bf16.mxu0 0
        %1273 = vmatpush1.bf16.xpose.msra.mxu0 0
        %1274 = vmatprep.subr.bf16.mxu0 0
        %1275 = vmatpush1.bf16.xpose.msra.mxu0 0
        %1276 = vmatprep.subr.bf16.mxu0 0
        %1277 = vmatpush1.bf16.xpose.msra.mxu0 0
        %1278 = vmatprep.subr.bf16.mxu0 0
        %1279 = vmatpush1.bf16.xpose.msra.mxu0 0
        %1280 = vmatprep.subr.bf16.mxu0 0
        %1281 = vmatpush1.bf16.xpose.msra.mxu0 0
        %1282 = vmatprep.subr.bf16.mxu0 0
        %1283 = vmatpush1.bf16.xpose.msra.mxu0 0
        %1284 = vmatprep.mubr.bf16.mxu0 0
        %1285 = vmatmul.mubr.bf16.gmra.mrb[0].mxu0 %v1247
        %v1286 = vpop.f32.mrb[0].mxu0
        %v1287 = vadd.f32 0.0, %v1286
        %v1288 = vpop.f32.mrb[0].mxu0
        %v1289 = vpop.f32.mrb[0].mxu0
        %v1290 = vpop.f32.mrb[0].mxu0
        %1291 = vdwg.mxu0
        %v1293 = vsel %vm1245, %v1238, 0
        %v1296 = vsel %vm1245, %v1242, 0
        %1298 = vmatprep.subr.bf16.mxu0 0
        %1299 = vmatpush1.bf16.xpose.msra.mxu0 %v1296
        %1300 = vmatprep.subr.bf16.mxu0 0
        %1301 = vmatpush1.bf16.xpose.msra.mxu0 0
        %1302 = vmatprep.subr.bf16.mxu0 0
        %1303 = vmatpush1.bf16.xpose.msra.mxu0 0
        %1304 = vmatprep.subr.bf16.mxu0 0
        %1305 = vmatpush1.bf16.xpose.msra.mxu0 0
        %1306 = vmatprep.subr.bf16.mxu0 0
        %1307 = vmatpush1.bf16.xpose.msra.mxu0 0
        %1308 = vmatprep.subr.bf16.mxu0 0
        %1309 = vmatpush1.bf16.xpose.msra.mxu0 0
        %1310 = vmatprep.subr.bf16.mxu0 0
        %1311 = vmatpush1.bf16.xpose.msra.mxu0 0
        %1312 = vmatprep.subr.bf16.mxu0 0
        %1313 = vmatpush1.bf16.xpose.msra.mxu0 0
        %1314 = vmatprep.subr.bf16.mxu0 0
        %1315 = vmatpush1.bf16.xpose.msra.mxu0 0
        %1316 = vmatprep.subr.bf16.mxu0 0
        %1317 = vmatpush1.bf16.xpose.msra.mxu0 0
        %1318 = vmatprep.subr.bf16.mxu0 0
        %1319 = vmatpush1.bf16.xpose.msra.mxu0 0
        %1320 = vmatprep.subr.bf16.mxu0 0
        %1321 = vmatpush1.bf16.xpose.msra.mxu0 0
        %1322 = vmatprep.subr.bf16.mxu0 0
        %1323 = vmatpush1.bf16.xpose.msra.mxu0 0
        %1324 = vmatprep.subr.bf16.mxu0 0
        %1325 = vmatpush1.bf16.xpose.msra.mxu0 0
        %1326 = vmatprep.subr.bf16.mxu0 0
        %1327 = vmatpush1.bf16.xpose.msra.mxu0 0
        %1328 = vmatprep.subr.bf16.mxu0 0
        %1329 = vmatpush1.bf16.xpose.msra.mxu0 0
        %1330 = vmatprep.mubr.bf16.mxu0 0
        %1331 = vmatmul.mubr.bf16.gmra.mrb[0].mxu0 %v1293
        %v1332 = vpop.f32.mrb[0].mxu0
        %v1333 = vadd.f32 0.0, %v1332
        %v1334 = vpop.f32.mrb[0].mxu0
        %v1335 = vpop.f32.mrb[0].mxu0
        %v1336 = vpop.f32.mrb[0].mxu0
        %1337 = vdwg.mxu0
        %v1339 = vsel %vm1245, %v1239, 0
        %v1342 = vsel %vm1245, %v1243, 0
        %1344 = vmatprep.subr.bf16.mxu0 0
        %1345 = vmatpush1.bf16.xpose.msra.mxu0 %v1342
        %1346 = vmatprep.subr.bf16.mxu0 0
        %1347 = vmatpush1.bf16.xpose.msra.mxu0 0
        %1348 = vmatprep.subr.bf16.mxu0 0
        %1349 = vmatpush1.bf16.xpose.msra.mxu0 0
        %1350 = vmatprep.subr.bf16.mxu0 0
        %1351 = vmatpush1.bf16.xpose.msra.mxu0 0
        %1352 = vmatprep.subr.bf16.mxu0 0
        %1353 = vmatpush1.bf16.xpose.msra.mxu0 0
        %1354 = vmatprep.subr.bf16.mxu0 0
        %1355 = vmatpush1.bf16.xpose.msra.mxu0 0
        %1356 = vmatprep.subr.bf16.mxu0 0
        %1357 = vmatpush1.bf16.xpose.msra.mxu0 0
        %1358 = vmatprep.subr.bf16.mxu0 0
        %1359 = vmatpush1.bf16.xpose.msra.mxu0 0
        %1360 = vmatprep.subr.bf16.mxu0 0
        %1361 = vmatpush1.bf16.xpose.msra.mxu0 0
        %1362 = vmatprep.subr.bf16.mxu0 0
        %1363 = vmatpush1.bf16.xpose.msra.mxu0 0
        %1364 = vmatprep.subr.bf16.mxu0 0
        %1365 = vmatpush1.bf16.xpose.msra.mxu0 0
        %1366 = vmatprep.subr.bf16.mxu0 0
        %1367 = vmatpush1.bf16.xpose.msra.mxu0 0
        %1368 = vmatprep.subr.bf16.mxu0 0
        %1369 = vmatpush1.bf16.xpose.msra.mxu0 0
        %1370 = vmatprep.subr.bf16.mxu0 0
        %1371 = vmatpush1.bf16.xpose.msra.mxu0 0
        %1372 = vmatprep.subr.bf16.mxu0 0
        %1373 = vmatpush1.bf16.xpose.msra.mxu0 0
        %1374 = vmatprep.subr.bf16.mxu0 0
        %1375 = vmatpush1.bf16.xpose.msra.mxu0 0
        %1376 = vmatprep.mubr.bf16.mxu0 0
        %1377 = vmatmul.mubr.bf16.gmra.mrb[0].mxu0 %v1339
        %v1378 = vpop.f32.mrb[0].mxu0
        %v1379 = vadd.f32 0.0, %v1378
        %v1380 = vpop.f32.mrb[0].mxu0
        %v1381 = vpop.f32.mrb[0].mxu0
        %v1382 = vpop.f32.mrb[0].mxu0
        %1383 = vdwg.mxu0
        %v1385 = vsel %vm1245, %v1240, 0
        %v1388 = vsel %vm1245, %v1244, 0
        %1390 = vmatprep.subr.bf16.mxu0 0
        %1391 = vmatpush1.bf16.xpose.msra.mxu0 %v1388
        %1392 = vmatprep.subr.bf16.mxu0 0
        %1393 = vmatpush1.bf16.xpose.msra.mxu0 0
        %1394 = vmatprep.subr.bf16.mxu0 0
        %1395 = vmatpush1.bf16.xpose.msra.mxu0 0
        %1396 = vmatprep.subr.bf16.mxu0 0
        %1397 = vmatpush1.bf16.xpose.msra.mxu0 0
        %1398 = vmatprep.subr.bf16.mxu0 0
        %1399 = vmatpush1.bf16.xpose.msra.mxu0 0
        %1400 = vmatprep.subr.bf16.mxu0 0
        %1401 = vmatpush1.bf16.xpose.msra.mxu0 0
        %1402 = vmatprep.subr.bf16.mxu0 0
        %1403 = vmatpush1.bf16.xpose.msra.mxu0 0
        %1404 = vmatprep.subr.bf16.mxu0 0
        %1405 = vmatpush1.bf16.xpose.msra.mxu0 0
        %1406 = vmatprep.subr.bf16.mxu0 0
        %1407 = vmatpush1.bf16.xpose.msra.mxu0 0
        %1408 = vmatprep.subr.bf16.mxu0 0
        %1409 = vmatpush1.bf16.xpose.msra.mxu0 0
        %1410 = vmatprep.subr.bf16.mxu0 0
        %1411 = vmatpush1.bf16.xpose.msra.mxu0 0
        %1412 = vmatprep.subr.bf16.mxu0 0
        %1413 = vmatpush1.bf16.xpose.msra.mxu0 0
        %1414 = vmatprep.subr.bf16.mxu0 0
        %1415 = vmatpush1.bf16.xpose.msra.mxu0 0
        %1416 = vmatprep.subr.bf16.mxu0 0
        %1417 = vmatpush1.bf16.xpose.msra.mxu0 0
        %1418 = vmatprep.subr.bf16.mxu0 0
        %1419 = vmatpush1.bf16.xpose.msra.mxu0 0
        %1420 = vmatprep.subr.bf16.mxu0 0
        %1421 = vmatpush1.bf16.xpose.msra.mxu0 0
        %1422 = vmatprep.mubr.bf16.mxu0 0
        %1423 = vmatmul.mubr.bf16.gmra.mrb[0].mxu0 %v1385
        %v1424 = vpop.f32.mrb[0].mxu0
        %v1425 = vadd.f32 0.0, %v1424
        %v1426 = vpop.f32.mrb[0].mxu0
        %v1427 = vpop.f32.mrb[0].mxu0
        %v1428 = vpop.f32.mrb[0].mxu0
        %1429 = vdwg.mxu0
        %v1430 = vmul.f32 %v1287, 0.35355338
        %v1431 = vmul.f32 %v1333, 0.35355338
        %v1432 = vmul.f32 %v1379, 0.35355338
        %v1433 = vmul.f32 %v1425, 0.35355338
        %vm1434 = vcmp.gt.f32.partialorder %v590, 0.5
        %v1435 = vsel %vm1434, 1, 0
        %vm1436 = vcmp.eq.s32.totalorder %v1435, 1
        %v1437 = vsel %vm1436, %v1430, -1e+09
        %v1438 = vsel %vm1436, %v1431, -1e+09
        %v1439 = vsel %vm1436, %v1432, -1e+09
        %v1440 = vsel %vm1436, %v1433, -1e+09
        %v1441 = vsel %vm1245, %v1437, -inf
        %1442 = vmax.xlane.f32.xlu0 %v1441
        %v1443 = vpop.xlane.xlu0 %1442
        %v1444 = vsel %vm1245, %v1438, -inf
        %1445 = vmax.xlane.f32.xlu0 %v1444
        %v1446 = vpop.xlane.xlu0 %1445
        %v1447 = vsel %vm1245, %v1439, -inf
        %1448 = vmax.xlane.f32.xlu0 %v1447
        %v1449 = vpop.xlane.xlu0 %1448
        %v1450 = vsel %vm1245, %v1440, -inf
        %1451 = vmax.xlane.f32.xlu0 %v1450
        %v1452 = vpop.xlane.xlu0 %1451
        %v1453 = vsub.f32 %v1437, %v1443
        %v1454 = vsub.f32 %v1438, %v1446
        %v1455 = vsub.f32 %v1439, %v1449
        %v1456 = vsub.f32 %v1440, %v1452
        %v1457 = vmul.f32 %v1453, 1.442695
        %v1458 = vpow.pop %v1457
        %v1459 = vmul.f32 %v1454, 1.442695
        %v1460 = vpow.pop %v1459
        %v1461 = vmul.f32 %v1455, 1.442695
        %v1462 = vpow.pop %v1461
        %v1463 = vmul.f32 %v1456, 1.442695
        %v1464 = vpow.pop %v1463
        %v1465 = vsel %vm1245, %v1458, 0.0
        %1466 = vadd.xlane.f32.xlu0 %v1465
        %v1467 = vpop.xlane.xlu0 %1466
        %v1468 = vsel %vm1245, %v1460, 0.0
        %1469 = vadd.xlane.f32.xlu0 %v1468
        %v1470 = vpop.xlane.xlu0 %1469
        %v1471 = vsel %vm1245, %v1462, 0.0
        %1472 = vadd.xlane.f32.xlu0 %v1471
        %v1473 = vpop.xlane.xlu0 %1472
        %v1474 = vsel %vm1245, %v1464, 0.0
        %1475 = vadd.xlane.f32.xlu0 %v1474
        %v1476 = vpop.xlane.xlu0 %1475
        %v1477 = vrcp.pop %v1467
        %v1478 = vrcp.pop %v1470
        %v1479 = vrcp.pop %v1473
        %v1480 = vrcp.pop %v1476
        %v1481 = vmul.f32 %v1458, %v1477
        %v1482 = vmul.f32 %v1460, %v1478
        %v1483 = vmul.f32 %v1462, %v1479
        %v1484 = vmul.f32 %v1464, %v1480
        %v1485 = vpack.c.bf16 %v1481, %v1481
        %v1486 = vpack.c.bf16 %v1482, %v1482
        %v1487 = vpack.c.bf16 %v1483, %v1483
        %v1488 = vpack.c.bf16 %v1484, %v1484
        %v1489 = vpack.c.bf16 %v1112, %v1112
        %v1490 = vpack.c.bf16 %v1152, %v1152
        %v1491 = vpack.c.bf16 %v1192, %v1192
        %v1492 = vpack.c.bf16 %v1232, %v1232
        %v1494 = vsel %vm1245, %v1485, 0
        %vm1496 = vcmask 1043456
        %v1498 = vsel %vm1496, %v1489, 0
        %1500 = vmatprep.subr.bf16.mxu0 0
        %1501 = vmatpush1.bf16.msra.mxu0 %v1498
        %1502 = vmatprep.subr.bf16.mxu0 0
        %1503 = vmatpush1.bf16.msra.mxu0 0
        %1504 = vmatprep.subr.bf16.mxu0 0
        %1505 = vmatpush1.bf16.msra.mxu0 0
        %1506 = vmatprep.subr.bf16.mxu0 0
        %1507 = vmatpush1.bf16.msra.mxu0 0
        %1508 = vmatprep.subr.bf16.mxu0 0
        %1509 = vmatpush1.bf16.msra.mxu0 0
        %1510 = vmatprep.subr.bf16.mxu0 0
        %1511 = vmatpush1.bf16.msra.mxu0 0
        %1512 = vmatprep.subr.bf16.mxu0 0
        %1513 = vmatpush1.bf16.msra.mxu0 0
        %1514 = vmatprep.subr.bf16.mxu0 0
        %1515 = vmatpush1.bf16.msra.mxu0 0
        %1516 = vmatprep.subr.bf16.mxu0 0
        %1517 = vmatpush1.bf16.msra.mxu0 0
        %1518 = vmatprep.subr.bf16.mxu0 0
        %1519 = vmatpush1.bf16.msra.mxu0 0
        %1520 = vmatprep.subr.bf16.mxu0 0
        %1521 = vmatpush1.bf16.msra.mxu0 0
        %1522 = vmatprep.subr.bf16.mxu0 0
        %1523 = vmatpush1.bf16.msra.mxu0 0
        %1524 = vmatprep.subr.bf16.mxu0 0
        %1525 = vmatpush1.bf16.msra.mxu0 0
        %1526 = vmatprep.subr.bf16.mxu0 0
        %1527 = vmatpush1.bf16.msra.mxu0 0
        %1528 = vmatprep.subr.bf16.mxu0 0
        %1529 = vmatpush1.bf16.msra.mxu0 0
        %1530 = vmatprep.subr.bf16.mxu0 0
        %1531 = vmatpush1.bf16.msra.mxu0 0
        %1532 = vmatprep.mubr.bf16.mxu0 0
        %1533 = vmatmul.mubr.bf16.gmra.mrb[0].mxu0 %v1494
        %v1534 = vpop.f32.mrb[0].mxu0
        %v1535 = vadd.f32 0.0, %v1534
        %v1536 = vpop.f32.mrb[0].mxu0
        %v1537 = vpop.f32.mrb[0].mxu0
        %v1538 = vpop.f32.mrb[0].mxu0
        %1539 = vdwg.mxu0
        %v1541 = vsel %vm1245, %v1486, 0
        %v1544 = vsel %vm1496, %v1490, 0
        %1546 = vmatprep.subr.bf16.mxu0 0
        %1547 = vmatpush1.bf16.msra.mxu0 %v1544
        %1548 = vmatprep.subr.bf16.mxu0 0
        %1549 = vmatpush1.bf16.msra.mxu0 0
        %1550 = vmatprep.subr.bf16.mxu0 0
        %1551 = vmatpush1.bf16.msra.mxu0 0
        %1552 = vmatprep.subr.bf16.mxu0 0
        %1553 = vmatpush1.bf16.msra.mxu0 0
        %1554 = vmatprep.subr.bf16.mxu0 0
        %1555 = vmatpush1.bf16.msra.mxu0 0
        %1556 = vmatprep.subr.bf16.mxu0 0
        %1557 = vmatpush1.bf16.msra.mxu0 0
        %1558 = vmatprep.subr.bf16.mxu0 0
        %1559 = vmatpush1.bf16.msra.mxu0 0
        %1560 = vmatprep.subr.bf16.mxu0 0
        %1561 = vmatpush1.bf16.msra.mxu0 0
        %1562 = vmatprep.subr.bf16.mxu0 0
        %1563 = vmatpush1.bf16.msra.mxu0 0
        %1564 = vmatprep.subr.bf16.mxu0 0
        %1565 = vmatpush1.bf16.msra.mxu0 0
        %1566 = vmatprep.subr.bf16.mxu0 0
        %1567 = vmatpush1.bf16.msra.mxu0 0
        %1568 = vmatprep.subr.bf16.mxu0 0
        %1569 = vmatpush1.bf16.msra.mxu0 0
        %1570 = vmatprep.subr.bf16.mxu0 0
        %1571 = vmatpush1.bf16.msra.mxu0 0
        %1572 = vmatprep.subr.bf16.mxu0 0
        %1573 = vmatpush1.bf16.msra.mxu0 0
        %1574 = vmatprep.subr.bf16.mxu0 0
        %1575 = vmatpush1.bf16.msra.mxu0 0
        %1576 = vmatprep.subr.bf16.mxu0 0
        %1577 = vmatpush1.bf16.msra.mxu0 0
        %1578 = vmatprep.mubr.bf16.mxu0 0
        %1579 = vmatmul.mubr.bf16.gmra.mrb[0].mxu0 %v1541
        %v1580 = vpop.f32.mrb[0].mxu0
        %v1581 = vadd.f32 0.0, %v1580
        %v1582 = vpop.f32.mrb[0].mxu0
        %v1583 = vpop.f32.mrb[0].mxu0
        %v1584 = vpop.f32.mrb[0].mxu0
        %1585 = vdwg.mxu0
        %v1587 = vsel %vm1245, %v1487, 0
        %v1590 = vsel %vm1496, %v1491, 0
        %1592 = vmatprep.subr.bf16.mxu0 0
        %1593 = vmatpush1.bf16.msra.mxu0 %v1590
        %1594 = vmatprep.subr.bf16.mxu0 0
        %1595 = vmatpush1.bf16.msra.mxu0 0
        %1596 = vmatprep.subr.bf16.mxu0 0
        %1597 = vmatpush1.bf16.msra.mxu0 0
        %1598 = vmatprep.subr.bf16.mxu0 0
        %1599 = vmatpush1.bf16.msra.mxu0 0
        %1600 = vmatprep.subr.bf16.mxu0 0
        %1601 = vmatpush1.bf16.msra.mxu0 0
        %1602 = vmatprep.subr.bf16.mxu0 0
        %1603 = vmatpush1.bf16.msra.mxu0 0
        %1604 = vmatprep.subr.bf16.mxu0 0
        %1605 = vmatpush1.bf16.msra.mxu0 0
        %1606 = vmatprep.subr.bf16.mxu0 0
        %1607 = vmatpush1.bf16.msra.mxu0 0
        %1608 = vmatprep.subr.bf16.mxu0 0
        %1609 = vmatpush1.bf16.msra.mxu0 0
        %1610 = vmatprep.subr.bf16.mxu0 0
        %1611 = vmatpush1.bf16.msra.mxu0 0
        %1612 = vmatprep.subr.bf16.mxu0 0
        %1613 = vmatpush1.bf16.msra.mxu0 0
        %1614 = vmatprep.subr.bf16.mxu0 0
        %1615 = vmatpush1.bf16.msra.mxu0 0
        %1616 = vmatprep.subr.bf16.mxu0 0
        %1617 = vmatpush1.bf16.msra.mxu0 0
        %1618 = vmatprep.subr.bf16.mxu0 0
        %1619 = vmatpush1.bf16.msra.mxu0 0
        %1620 = vmatprep.subr.bf16.mxu0 0
        %1621 = vmatpush1.bf16.msra.mxu0 0
        %1622 = vmatprep.subr.bf16.mxu0 0
        %1623 = vmatpush1.bf16.msra.mxu0 0
        %1624 = vmatprep.mubr.bf16.mxu0 0
        %1625 = vmatmul.mubr.bf16.gmra.mrb[0].mxu0 %v1587
        %v1626 = vpop.f32.mrb[0].mxu0
        %v1627 = vadd.f32 0.0, %v1626
        %v1628 = vpop.f32.mrb[0].mxu0
        %v1629 = vpop.f32.mrb[0].mxu0
        %v1630 = vpop.f32.mrb[0].mxu0
        %1631 = vdwg.mxu0
        %v1633 = vsel %vm1245, %v1488, 0
        %v1636 = vsel %vm1496, %v1492, 0
        %1638 = vmatprep.subr.bf16.mxu0 0
        %1639 = vmatpush1.bf16.msra.mxu0 %v1636
        %1640 = vmatprep.subr.bf16.mxu0 0
        %1641 = vmatpush1.bf16.msra.mxu0 0
        %1642 = vmatprep.subr.bf16.mxu0 0
        %1643 = vmatpush1.bf16.msra.mxu0 0
        %1644 = vmatprep.subr.bf16.mxu0 0
        %1645 = vmatpush1.bf16.msra.mxu0 0
        %1646 = vmatprep.subr.bf16.mxu0 0
        %1647 = vmatpush1.bf16.msra.mxu0 0
        %1648 = vmatprep.subr.bf16.mxu0 0
        %1649 = vmatpush1.bf16.msra.mxu0 0
        %1650 = vmatprep.subr.bf16.mxu0 0
        %1651 = vmatpush1.bf16.msra.mxu0 0
        %1652 = vmatprep.subr.bf16.mxu0 0
        %1653 = vmatpush1.bf16.msra.mxu0 0
        %1654 = vmatprep.subr.bf16.mxu0 0
        %1655 = vmatpush1.bf16.msra.mxu0 0
        %1656 = vmatprep.subr.bf16.mxu0 0
        %1657 = vmatpush1.bf16.msra.mxu0 0
        %1658 = vmatprep.subr.bf16.mxu0 0
        %1659 = vmatpush1.bf16.msra.mxu0 0
        %1660 = vmatprep.subr.bf16.mxu0 0
        %1661 = vmatpush1.bf16.msra.mxu0 0
        %1662 = vmatprep.subr.bf16.mxu0 0
        %1663 = vmatpush1.bf16.msra.mxu0 0
        %1664 = vmatprep.subr.bf16.mxu0 0
        %1665 = vmatpush1.bf16.msra.mxu0 0
        %1666 = vmatprep.subr.bf16.mxu0 0
        %1667 = vmatpush1.bf16.msra.mxu0 0
        %1668 = vmatprep.subr.bf16.mxu0 0
        %1669 = vmatpush1.bf16.msra.mxu0 0
        %1670 = vmatprep.mubr.bf16.mxu0 0
        %1671 = vmatmul.mubr.bf16.gmra.mrb[0].mxu0 %v1633
        %v1672 = vpop.f32.mrb[0].mxu0
        %v1673 = vadd.f32 0.0, %v1672
        %v1674 = vpop.f32.mrb[0].mxu0
        %v1675 = vpop.f32.mrb[0].mxu0
        %v1676 = vpop.f32.mrb[0].mxu0
        %1677 = vdwg.mxu0
        %v1678 = vpack.c.bf16 %v1535, %v1535
        %v1679 = vpack.c.bf16 %v1581, %v1581
        %v1680 = vpack.c.bf16 %v1627, %v1627
        %v1681 = vpack.c.bf16 %v1673, %v1673
        %v1682 = vpack.c.bf16 %v639, %v639
        %v1683 = vpack.c.bf16 %v640, %v640
        %v1684 = vpack.c.bf16 %v641, %v641
        %v1685 = vpack.c.bf16 %v642, %v642
        %v1687 = vsel %vm1245, %v1678, 0
        %v1690 = vsel %vm1496, %v1682, 0
        %1692 = vmatprep.subr.bf16.mxu0 0
        %1693 = vmatpush1.bf16.msra.mxu0 %v1690
        %1694 = vmatprep.subr.bf16.mxu0 0
        %1695 = vmatpush1.bf16.msra.mxu0 0
        %1696 = vmatprep.subr.bf16.mxu0 0
        %1697 = vmatpush1.bf16.msra.mxu0 0
        %1698 = vmatprep.subr.bf16.mxu0 0
        %1699 = vmatpush1.bf16.msra.mxu0 0
        %1700 = vmatprep.subr.bf16.mxu0 0
        %1701 = vmatpush1.bf16.msra.mxu0 0
        %1702 = vmatprep.subr.bf16.mxu0 0
        %1703 = vmatpush1.bf16.msra.mxu0 0
        %1704 = vmatprep.subr.bf16.mxu0 0
        %1705 = vmatpush1.bf16.msra.mxu0 0
        %1706 = vmatprep.subr.bf16.mxu0 0
        %1707 = vmatpush1.bf16.msra.mxu0 0
        %1708 = vmatprep.subr.bf16.mxu0 0
        %1709 = vmatpush1.bf16.msra.mxu0 0
        %1710 = vmatprep.subr.bf16.mxu0 0
        %1711 = vmatpush1.bf16.msra.mxu0 0
        %1712 = vmatprep.subr.bf16.mxu0 0
        %1713 = vmatpush1.bf16.msra.mxu0 0
        %1714 = vmatprep.subr.bf16.mxu0 0
        %1715 = vmatpush1.bf16.msra.mxu0 0
        %1716 = vmatprep.subr.bf16.mxu0 0
        %1717 = vmatpush1.bf16.msra.mxu0 0
        %1718 = vmatprep.subr.bf16.mxu0 0
        %1719 = vmatpush1.bf16.msra.mxu0 0
        %1720 = vmatprep.subr.bf16.mxu0 0
        %1721 = vmatpush1.bf16.msra.mxu0 0
        %1722 = vmatprep.subr.bf16.mxu0 0
        %1723 = vmatpush1.bf16.msra.mxu0 0
        %1724 = vmatprep.mubr.bf16.mxu0 0
        %1725 = vmatmul.mubr.bf16.gmra.mrb[0].mxu0 %v1687
        %v1726 = vpop.f32.mrb[0].mxu0
        %v1727 = vadd.f32 0.0, %v1726
        %v1728 = vpop.f32.mrb[0].mxu0
        %v1729 = vpop.f32.mrb[0].mxu0
        %v1730 = vpop.f32.mrb[0].mxu0
        %1731 = vdwg.mxu0
        %v1733 = vsel %vm1245, %v1679, 0
        %v1736 = vsel %vm1496, %v1683, 0
        %1738 = vmatprep.subr.bf16.mxu0 0
        %1739 = vmatpush1.bf16.msra.mxu0 %v1736
        %1740 = vmatprep.subr.bf16.mxu0 0
        %1741 = vmatpush1.bf16.msra.mxu0 0
        %1742 = vmatprep.subr.bf16.mxu0 0
        %1743 = vmatpush1.bf16.msra.mxu0 0
        %1744 = vmatprep.subr.bf16.mxu0 0
        %1745 = vmatpush1.bf16.msra.mxu0 0
        %1746 = vmatprep.subr.bf16.mxu0 0
        %1747 = vmatpush1.bf16.msra.mxu0 0
        %1748 = vmatprep.subr.bf16.mxu0 0
        %1749 = vmatpush1.bf16.msra.mxu0 0
        %1750 = vmatprep.subr.bf16.mxu0 0
        %1751 = vmatpush1.bf16.msra.mxu0 0
        %1752 = vmatprep.subr.bf16.mxu0 0
        %1753 = vmatpush1.bf16.msra.mxu0 0
        %1754 = vmatprep.subr.bf16.mxu0 0
        %1755 = vmatpush1.bf16.msra.mxu0 0
        %1756 = vmatprep.subr.bf16.mxu0 0
        %1757 = vmatpush1.bf16.msra.mxu0 0
        %1758 = vmatprep.subr.bf16.mxu0 0
        %1759 = vmatpush1.bf16.msra.mxu0 0
        %1760 = vmatprep.subr.bf16.mxu0 0
        %1761 = vmatpush1.bf16.msra.mxu0 0
        %1762 = vmatprep.subr.bf16.mxu0 0
        %1763 = vmatpush1.bf16.msra.mxu0 0
        %1764 = vmatprep.subr.bf16.mxu0 0
        %1765 = vmatpush1.bf16.msra.mxu0 0
        %1766 = vmatprep.subr.bf16.mxu0 0
        %1767 = vmatpush1.bf16.msra.mxu0 0
        %1768 = vmatprep.subr.bf16.mxu0 0
        %1769 = vmatpush1.bf16.msra.mxu0 0
        %1770 = vmatprep.mubr.bf16.mxu0 0
        %1771 = vmatmul.mubr.bf16.gmra.mrb[0].mxu0 %v1733
        %v1772 = vpop.f32.mrb[0].mxu0
        %v1773 = vadd.f32 0.0, %v1772
        %v1774 = vpop.f32.mrb[0].mxu0
        %v1775 = vpop.f32.mrb[0].mxu0
        %v1776 = vpop.f32.mrb[0].mxu0
        %1777 = vdwg.mxu0
        %v1779 = vsel %vm1245, %v1680, 0
        %v1782 = vsel %vm1496, %v1684, 0
        %1784 = vmatprep.subr.bf16.mxu0 0
        %1785 = vmatpush1.bf16.msra.mxu0 %v1782
        %1786 = vmatprep.subr.bf16.mxu0 0
        %1787 = vmatpush1.bf16.msra.mxu0 0
        %1788 = vmatprep.subr.bf16.mxu0 0
        %1789 = vmatpush1.bf16.msra.mxu0 0
        %1790 = vmatprep.subr.bf16.mxu0 0
        %1791 = vmatpush1.bf16.msra.mxu0 0
        %1792 = vmatprep.subr.bf16.mxu0 0
        %1793 = vmatpush1.bf16.msra.mxu0 0
        %1794 = vmatprep.subr.bf16.mxu0 0
        %1795 = vmatpush1.bf16.msra.mxu0 0
        %1796 = vmatprep.subr.bf16.mxu0 0
        %1797 = vmatpush1.bf16.msra.mxu0 0
        %1798 = vmatprep.subr.bf16.mxu0 0
        %1799 = vmatpush1.bf16.msra.mxu0 0
        %1800 = vmatprep.subr.bf16.mxu0 0
        %1801 = vmatpush1.bf16.msra.mxu0 0
        %1802 = vmatprep.subr.bf16.mxu0 0
        %1803 = vmatpush1.bf16.msra.mxu0 0
        %1804 = vmatprep.subr.bf16.mxu0 0
        %1805 = vmatpush1.bf16.msra.mxu0 0
        %1806 = vmatprep.subr.bf16.mxu0 0
        %1807 = vmatpush1.bf16.msra.mxu0 0
        %1808 = vmatprep.subr.bf16.mxu0 0
        %1809 = vmatpush1.bf16.msra.mxu0 0
        %1810 = vmatprep.subr.bf16.mxu0 0
        %1811 = vmatpush1.bf16.msra.mxu0 0
        %1812 = vmatprep.subr.bf16.mxu0 0
        %1813 = vmatpush1.bf16.msra.mxu0 0
        %1814 = vmatprep.subr.bf16.mxu0 0
        %1815 = vmatpush1.bf16.msra.mxu0 0
        %1816 = vmatprep.mubr.bf16.mxu0 0
        %1817 = vmatmul.mubr.bf16.gmra.mrb[0].mxu0 %v1779
        %v1818 = vpop.f32.mrb[0].mxu0
        %v1819 = vadd.f32 0.0, %v1818
        %v1820 = vpop.f32.mrb[0].mxu0
        %v1821 = vpop.f32.mrb[0].mxu0
        %v1822 = vpop.f32.mrb[0].mxu0
        %1823 = vdwg.mxu0
        %v1825 = vsel %vm1245, %v1681, 0
        %v1828 = vsel %vm1496, %v1685, 0
        %1830 = vmatprep.subr.bf16.mxu0 0
        %1831 = vmatpush1.bf16.msra.mxu0 %v1828
        %1832 = vmatprep.subr.bf16.mxu0 0
        %1833 = vmatpush1.bf16.msra.mxu0 0
        %1834 = vmatprep.subr.bf16.mxu0 0
        %1835 = vmatpush1.bf16.msra.mxu0 0
        %1836 = vmatprep.subr.bf16.mxu0 0
        %1837 = vmatpush1.bf16.msra.mxu0 0
        %1838 = vmatprep.subr.bf16.mxu0 0
        %1839 = vmatpush1.bf16.msra.mxu0 0
        %1840 = vmatprep.subr.bf16.mxu0 0
        %1841 = vmatpush1.bf16.msra.mxu0 0
        %1842 = vmatprep.subr.bf16.mxu0 0
        %1843 = vmatpush1.bf16.msra.mxu0 0
        %1844 = vmatprep.subr.bf16.mxu0 0
        %1845 = vmatpush1.bf16.msra.mxu0 0
        %1846 = vmatprep.subr.bf16.mxu0 0
        %1847 = vmatpush1.bf16.msra.mxu0 0
        %1848 = vmatprep.subr.bf16.mxu0 0
        %1849 = vmatpush1.bf16.msra.mxu0 0
        %1850 = vmatprep.subr.bf16.mxu0 0
        %1851 = vmatpush1.bf16.msra.mxu0 0
        %1852 = vmatprep.subr.bf16.mxu0 0
        %1853 = vmatpush1.bf16.msra.mxu0 0
        %1854 = vmatprep.subr.bf16.mxu0 0
        %1855 = vmatpush1.bf16.msra.mxu0 0
        %1856 = vmatprep.subr.bf16.mxu0 0
        %1857 = vmatpush1.bf16.msra.mxu0 0
        %1858 = vmatprep.subr.bf16.mxu0 0
        %1859 = vmatpush1.bf16.msra.mxu0 0
        %1860 = vmatprep.subr.bf16.mxu0 0
        %1861 = vmatpush1.bf16.msra.mxu0 0
        %1862 = vmatprep.mubr.bf16.mxu0 0
        %1863 = vmatmul.mubr.bf16.gmra.mrb[0].mxu0 %v1825
        %v1864 = vpop.f32.mrb[0].mxu0
        %v1865 = vadd.f32 0.0, %v1864
        %v1866 = vpop.f32.mrb[0].mxu0
        %v1867 = vpop.f32.mrb[0].mxu0
        %v1868 = vpop.f32.mrb[0].mxu0
        %1869 = vdwg.mxu0
        %v1870 = vsel %vm689, %v1727, 0.0
        %v1871 = vsel %vm689, %v1773, 0.0
        %v1872 = vadd.f32 %v1870, %v1871
        %v1873 = vsel %vm689, %v1819, 0.0
        %v1874 = vadd.f32 %v1872, %v1873
        %v1875 = vsel %vm689, %v1865, 0.0
        %v1876 = vadd.f32 %v1874, %v1875
        %v1878 = vlaneseq
        %v1879 = vshrl.u32 %v1878, 7
        %v1880 = vsub.s32 0, %v1879
        %v1881 = vrot.slane %v655, %v1880
        %v1883 = vadd.f32 %v1876, %v1881
        %v1884 = vld [vmem:[%s10] sm:$0x1]
        %v1885 = vld [vmem:[%s11] sm:$0x1]
        %v1886 = vadd.f32 %v589, %v1883
        %v1887 = vsel %vm689, %v1886, 0.0
        %1888 = vadd.xlane.f32.xlu0 %v1887
        %v1889 = vpop.xlane.xlu0 %1888
        %v1890 = vrcp.pop 32.0
        %v1891 = vmul.f32 %v1889, %v1890
        %v1892 = vsub.f32 %v1886, %v1891
        %v1893 = vmul.f32 %v1892, %v1892
        %v1894 = vsel %vm689, %v1893, 0.0
        %1895 = vadd.xlane.f32.xlu0 %v1894
        %v1896 = vpop.xlane.xlu0 %1895
        %v1897 = vmul.f32 %v1896, %v1890
        %v1898 = vadd.f32 %v1897, 1e-05
        %v1899 = vrsqrt.pop %v1898
        %v1900 = vmul.f32 %v1892, %v1899
        %v1902 = vlaneseq
        %v1903 = vshrl.u32 %v1902, 7
        %v1904 = vsub.s32 0, %v1903
        %v1905 = vrot.slane %v1884, %v1904
        %v1907 = vmul.f32 %v1900, %v1905
        %v1909 = vlaneseq
        %v1910 = vshrl.u32 %v1909, 7
        %v1911 = vsub.s32 0, %v1910
        %v1912 = vrot.slane %v1885, %v1911
        %v1914 = vadd.f32 %v1907, %v1912
        %v1915 = vld [vmem:[%s12] sm:$0xff]
        %v1916 = vld [vmem:[%s12 + $0x8] sm:$0xff]
        %v1917 = vld [vmem:[%s12 + $0x10] sm:$0xff]
        %v1918 = vld [vmem:[%s12 + $0x18] sm:$0xff]
        %v1919 = vld [vmem:[%s13] sm:$0x1]
        %v1920 = vld [vmem:[%s14] sm:$0xff]
        %v1921 = vld [vmem:[%s14 + $0x8] sm:$0xff]
        %v1922 = vld [vmem:[%s14 + $0x10] sm:$0xff]
        %v1923 = vld [vmem:[%s14 + $0x18] sm:$0xff]
        %v1924 = vld [vmem:[%s14 + $0x20] sm:$0xff]
        %v1925 = vld [vmem:[%s14 + $0x28] sm:$0xff]
        %v1926 = vld [vmem:[%s14 + $0x30] sm:$0xff]
        %v1927 = vld [vmem:[%s14 + $0x38] sm:$0xff]
        %v1928 = vld [vmem:[%s15] sm:$0x1]
        %v1929 = vpack.c.bf16 %v1914, %v1914
        %v1930 = vpack.c.bf16 %v1916, %v1915
        %v1931 = vpack.c.bf16 %v1918, %v1917
        %v1933 = vlaneseq
        %v1934 = vshrl.u32 %v1933, 7
        %v1935 = vsub.s32 0, %v1934
        %v1936 = vrot.slane %v1919, %v1935
        %v1939 = vsel %vm689, %v1929, 0
        %1941 = vmatprep.subr.bf16.mxu0 0
        %1942 = vmatpush1.bf16.msra.mxu0 %v1930
        %1943 = vmatprep.subr.bf16.mxu0 0
        %1944 = vmatpush1.bf16.msra.mxu0 %v1931
        %1945 = vmatprep.subr.bf16.mxu0 0
        %1946 = vmatpush1.bf16.msra.mxu0 0
        %1947 = vmatprep.subr.bf16.mxu0 0
        %1948 = vmatpush1.bf16.msra.mxu0 0
        %1949 = vmatprep.subr.bf16.mxu0 0
        %1950 = vmatpush1.bf16.msra.mxu0 0
        %1951 = vmatprep.subr.bf16.mxu0 0
        %1952 = vmatpush1.bf16.msra.mxu0 0
        %1953 = vmatprep.subr.bf16.mxu0 0
        %1954 = vmatpush1.bf16.msra.mxu0 0
        %1955 = vmatprep.subr.bf16.mxu0 0
        %1956 = vmatpush1.bf16.msra.mxu0 0
        %1957 = vmatprep.subr.bf16.mxu0 0
        %1958 = vmatpush1.bf16.msra.mxu0 0
        %1959 = vmatprep.subr.bf16.mxu0 0
        %1960 = vmatpush1.bf16.msra.mxu0 0
        %1961 = vmatprep.subr.bf16.mxu0 0
        %1962 = vmatpush1.bf16.msra.mxu0 0
        %1963 = vmatprep.subr.bf16.mxu0 0
        %1964 = vmatpush1.bf16.msra.mxu0 0
        %1965 = vmatprep.subr.bf16.mxu0 0
        %1966 = vmatpush1.bf16.msra.mxu0 0
        %1967 = vmatprep.subr.bf16.mxu0 0
        %1968 = vmatpush1.bf16.msra.mxu0 0
        %1969 = vmatprep.subr.bf16.mxu0 0
        %1970 = vmatpush1.bf16.msra.mxu0 0
        %1971 = vmatprep.subr.bf16.mxu0 0
        %1972 = vmatpush1.bf16.msra.mxu0 0
        %1973 = vmatprep.mubr.bf16.mxu0 0
        %1974 = vmatmul.mubr.bf16.gmra.mrb[0].mxu0 %v1939
        %v1975 = vpop.f32.mrb[0].mxu0
        %v1976 = vadd.f32 %v1936, %v1975
        %v1977 = vpop.f32.mrb[0].mxu0
        %v1978 = vpop.f32.mrb[0].mxu0
        %v1979 = vpop.f32.mrb[0].mxu0
        %1980 = vdwg.mxu0
        %v1981 = vmax.f32 %v1976, 0.0
        %v1982 = vpack.c.bf16 %v1981, %v1981
        %v1983 = vpack.c.bf16 %v1921, %v1920
        %v1984 = vpack.c.bf16 %v1923, %v1922
        %v1985 = vpack.c.bf16 %v1925, %v1924
        %v1986 = vpack.c.bf16 %v1927, %v1926
        %v1988 = vlaneseq
        %v1989 = vshrl.u32 %v1988, 7
        %v1990 = vsub.s32 0, %v1989
        %v1991 = vrot.slane %v1928, %v1990
        %vm1993 = vcmask 523264
        %v1995 = vsel %vm1993, %v1982, 0
        %1997 = vmatprep.subr.bf16.mxu0 0
        %1998 = vmatpush1.bf16.msra.mxu0 %v1983
        %1999 = vmatprep.subr.bf16.mxu0 0
        %2000 = vmatpush1.bf16.msra.mxu0 %v1984
        %2001 = vmatprep.subr.bf16.mxu0 0
        %2002 = vmatpush1.bf16.msra.mxu0 %v1985
        %2003 = vmatprep.subr.bf16.mxu0 0
        %2004 = vmatpush1.bf16.msra.mxu0 %v1986
        %2005 = vmatprep.subr.bf16.mxu0 0
        %2006 = vmatpush1.bf16.msra.mxu0 0
        %2007 = vmatprep.subr.bf16.mxu0 0
        %2008 = vmatpush1.bf16.msra.mxu0 0
        %2009 = vmatprep.subr.bf16.mxu0 0
        %2010 = vmatpush1.bf16.msra.mxu0 0
        %2011 = vmatprep.subr.bf16.mxu0 0
        %2012 = vmatpush1.bf16.msra.mxu0 0
        %2013 = vmatprep.subr.bf16.mxu0 0
        %2014 = vmatpush1.bf16.msra.mxu0 0
        %2015 = vmatprep.subr.bf16.mxu0 0
        %2016 = vmatpush1.bf16.msra.mxu0 0
        %2017 = vmatprep.subr.bf16.mxu0 0
        %2018 = vmatpush1.bf16.msra.mxu0 0
        %2019 = vmatprep.subr.bf16.mxu0 0
        %2020 = vmatpush1.bf16.msra.mxu0 0
        %2021 = vmatprep.subr.bf16.mxu0 0
        %2022 = vmatpush1.bf16.msra.mxu0 0
        %2023 = vmatprep.subr.bf16.mxu0 0
        %2024 = vmatpush1.bf16.msra.mxu0 0
        %2025 = vmatprep.subr.bf16.mxu0 0
        %2026 = vmatpush1.bf16.msra.mxu0 0
        %2027 = vmatprep.subr.bf16.mxu0 0
        %2028 = vmatpush1.bf16.msra.mxu0 0
        %2029 = vmatprep.mubr.bf16.mxu0 0
        %2030 = vmatmul.mubr.bf16.gmra.mrb[0].mxu0 %v1995
        %v2031 = vpop.f32.mrb[0].mxu0
        %v2032 = vadd.f32 %v1991, %v2031
        %v2033 = vpop.f32.mrb[0].mxu0
        %v2034 = vpop.f32.mrb[0].mxu0
        %v2035 = vpop.f32.mrb[0].mxu0
        %2036 = vdwg.mxu0
        %v2037 = vld [vmem:[%s16] sm:$0x1]
        %v2038 = vld [vmem:[%s17] sm:$0x1]
        %v2039 = vadd.f32 %v1914, %v2032
        %v2040 = vsel %vm689, %v2039, 0.0
        %2041 = vadd.xlane.f32.xlu0 %v2040
        %v2042 = vpop.xlane.xlu0 %2041
        %v2043 = vmul.f32 %v2042, %v1890
        %v2044 = vsub.f32 %v2039, %v2043
        %v2045 = vmul.f32 %v2044, %v2044
        %v2046 = vsel %vm689, %v2045, 0.0
        %2047 = vadd.xlane.f32.xlu0 %v2046
        %v2048 = vpop.xlane.xlu0 %2047
        %v2049 = vmul.f32 %v2048, %v1890
        %v2050 = vadd.f32 %v2049, 1e-05
        %v2051 = vrsqrt.pop %v2050
        %v2052 = vmul.f32 %v2044, %v2051
        %v2054 = vlaneseq
        %v2055 = vshrl.u32 %v2054, 7
        %v2056 = vsub.s32 0, %v2055
        %v2057 = vrot.slane %v2037, %v2056
        %v2059 = vmul.f32 %v2052, %v2057
        %v2061 = vlaneseq
        %v2062 = vshrl.u32 %v2061, 7
        %v2063 = vsub.s32 0, %v2062
        %v2064 = vrot.slane %v2038, %v2063
        %v2066 = vadd.f32 %v2059, %v2064
        %2067 = vst.msk [vmem:[%s579] sm:$0xff] %vm689, %v2066
        %s2068 = sand.u32 %s428, 1
        %s2069 = scalar_lea.sflag [#allocation3], %s2068
        %s2070 = sand.u32 %s428, 1
        %s2071 = smul.addr %s2070, 8
        %s2072 = scalar_lea.vmem [#allocation2], %s2071
        // Predicated region
        $region93: #{tpu_custom_call.1} parent=91 // pred_check
          %p2073 = pneg %p438
        $region94: #{tpu_custom_call.1} parent=91 // pred_check_branch
          %2075 = sbr.rel (%p2073) target = $region96
        $region95: #{tpu_custom_call.1} parent=91 // pred_region
          %s2077 = ssub.s32 128, 128
          %2078 = vsyncadd %s2069, %s2077
          %s2079 = smul.addr %s32, 128
          %s2080 = scalar_lea.hbm %s18, %s2079
          %s2082 = sshll.u32 %s2072, 4
          %s2083 = int_to_ptr.vmem [resolvable:$true] %s2082
          %2085 = dma.vmem_to_hbm [thread:$0]  %s2083, 128, %s2080, %s2069
        $region96: #{tpu_custom_call.1} parent=91 // pred_fallthru
          _
      $region92: #{tpu_custom_call.1} parent=5 // pred_fallthru
        _
      %p2086 = scmp.le.s32.totalorder 2, %s27
      // Predicated region
      $region97: #{tpu_custom_call.1} parent=5 // pred_check
        %p2087 = pneg %p2086
      $region98: #{tpu_custom_call.1} parent=5 // pred_check_branch
        %2089 = sbr.rel (%p2087) target = $region100
      $region99: #{tpu_custom_call.1} parent=5 // pred_region
        %s2090 = ssub.s32 %s27, 2
        // Predicated region
        $region101: #{tpu_custom_call.1} parent=99 // pred_check
          %p2091 = pneg %p444
        $region102: #{tpu_custom_call.1} parent=99 // pred_check_branch
          %2093 = sbr.rel (%p2091) target = $region104
        $region103: #{tpu_custom_call.1} parent=99 // pred_region
          %s2094 = sand.u32 %s429, 1
          %s2095 = scalar_lea.sflag [#allocation3], %s2094
          %s2096 = sand.u32 %s429, 1
          %s2097 = smul.addr %s2096, 8
          %s2098 = scalar_lea.vmem [#allocation2], %s2097
          %2099 = dma.done %s2095, 128
        $region104: #{tpu_custom_call.1} parent=99 // pred_fallthru
          _
      $region100: #{tpu_custom_call.1} parent=5 // pred_fallthru
        _
    $region6: #{tpu_custom_call.1} parent=1 // loop_footer
      %s31 = sadd.s32 1, %s27
    $region7: #{tpu_custom_call.1} parent=1 // loop_footer_branch
      %26 = sbr.rel target = $region3
    $region8: #{tpu_custom_call.1} parent=1 // loop_exit
      _
    %2100 = vsyncpa [#allocation3], 1
    %s2101 = scalar_lea.sflag [#allocation3], 1
    %2102 = vsyncpa %s2101, 1

</llo_original>
